<compile_context>
chip_gen: v7x
topology: tpu7x:2x2x1
jax: 0.10.0
libtpu: 0.0.40
codegen_flags: <defaults>
</compile_context>

<pallas_src>
import functools

import jax
import jax.numpy as jnp
from jax.experimental import pallas as pl
from jax.experimental.pallas import tpu as pltpu


def _round_up(v, m):
    return (v + m - 1) // m * m


def _pixel_unshuffle_kernel(x_ref, o_ref, t_ref, *, r):
    """x_ref: (Cb, th*r, W*r) -> o_ref: (Cb, r*r, th, W); t_ref: (Cb, W*r, th)."""
    _, thr, wr = x_ref.shape
    th, w = thr // r, wr // r
    for y in range(r):                       # static, unrolled (r is small)
        # Height-phase split: sublane-strided read straight from the ref
        # (rows y, y+r, ...) -- no padded (.., r, ..) intermediates.
        rows = x_ref[:, pl.ds(y, th, stride=r), :]            # (Cb, th, W*r)
        # One XLU transpose per height phase puts the width axis on sublanes.
        t_ref[...] = jnp.transpose(rows, (0, 2, 1))           # (Cb, W*r, th)
        for x in range(r):
            # Width-phase split: strided sublane read from the scratch.
            col = t_ref[:, pl.ds(x, w, stride=r), :]          # (Cb, W, th)
            # out channel offset within the group is q = y*r + x.
            o_ref[:, y * r + x] = jnp.transpose(col, (0, 2, 1))


def pixel_unshuffle(x, downscale_factor, *, vmem_budget_bytes=20 << 20):
    """NCHW PixelUnshuffle: (N, C, r*H, r*W) -> (N, r*r*C, H, W)."""
    r = int(downscale_factor)
    n, c, hr, wr = x.shape
    if hr % r or wr % r:
        raise ValueError("spatial dims must be divisible by downscale_factor")
    h, w = hr // r, wr // r
    nc = n * c
    itemsize = jnp.dtype(x.dtype).itemsize
    sub = {4: 8, 2: 16, 1: 32}.get(itemsize, 8)   # dtype-aware sublane packing

    def padded_bytes(shape):
        # Conservative VMEM footprint of a block: last dim padded to 128
        # lanes, second-to-last to the dtype's sublane packing.
        *lead, s, l = shape
        m = 1
        for d in lead:
            m *= d
        return m * _round_up(max(s, 1), sub) * _round_up(max(l, 1), 128) * itemsize

    def footprint(cb, th):
        return (2 * padded_bytes((cb, th * r, w * r))   # double-buffered input
                + 2 * padded_bytes((cb, r * r, th, w))  # double-buffered output
                + padded_bytes((cb, w * r, th))         # transpose scratch
                + padded_bytes((cb, th, w * r)))        # in-kernel temporaries

    # --- choose stripe height (Cb = 1 first) ------------------------------
    if h <= sub or footprint(1, h) <= vmem_budget_bytes:
        th = h                                  # full plane per step
    else:
        lo, hi = 1, pl.cdiv(h, sub)             # largest th = k*sub that fits
        while lo < hi:
            mid = (lo + hi + 1) // 2
            if footprint(1, mid * sub) <= vmem_budget_bytes:
                lo = mid
            else:
                hi = mid - 1
        th = lo * sub

    # --- choose channels per block (only when the full plane fits) ---------
    if th == h:
        cb = max(1, min(nc, vmem_budget_bytes // max(1, footprint(1, h))))
        while nc % cb:                          # keep channel blocks exact
            cb -= 1
    else:
        cb = 1

    xp = x.reshape(nc, hr, wr)                  # metadata-only
    grid = (pl.cdiv(nc, cb), pl.cdiv(h, th))    # ragged last stripe is masked

    out = pl.pallas_call(
        functools.partial(_pixel_unshuffle_kernel, r=r),
        out_shape=jax.ShapeDtypeStruct((nc, r * r, h, w), x.dtype),
        grid_spec=pltpu.PrefetchScalarGridSpec(
            num_scalar_prefetch=0,
            grid=grid,
            in_specs=[pl.BlockSpec((cb, th * r, w * r), lambda i, j: (i, j, 0))],
            out_specs=pl.BlockSpec((cb, r * r, th, w), lambda i, j: (i, 0, j, 0)),
            scratch_shapes=[pltpu.VMEM((cb, w * r, th), x.dtype)],
        ),
        compiler_params=pltpu.CompilerParams(
            dimension_semantics=("parallel", "parallel")),
    )(xp)

    return out.reshape(n, c * r * r, h, w)      # metadata-only


def pixel_unshuffle_ref(x, r):
    """Pure-JAX reference (same semantics as the torch grouped-conv trick)."""
    n, c, hr, wr = x.shape
    h, w = hr // r, wr // r
    y = x.reshape(n, c, h, r, w, r)
    y = jnp.transpose(y, (0, 1, 3, 5, 2, 4))
    return y.reshape(n, c * r * r, h, w)


if __name__ == "__main__":
    key = jax.random.PRNGKey(0)
    k1, k2, k3 = jax.random.split(key, 3)

    # (N, C, r*H, r*W) = (2, 4, 16, 16), r=2 -> (2, 16, 8, 8); Cb-blocked path.
    x1 = jax.random.normal(k1, (2, 4, 16, 16), jnp.float32)
    y1 = jax.block_until_ready(pixel_unshuffle(x1, 2))
    assert y1.shape == (2, 16, 8, 8), y1.shape
    assert bool(jnp.array_equal(y1, pixel_unshuffle_ref(x1, 2)))

    # r=4 with unaligned H/W (no wrapper pad/slice): (1, 2, 24, 40) -> (1, 32, 6, 10)
    x2 = jax.random.normal(k2, (1, 2, 24, 40), jnp.float32)
    y2 = jax.block_until_ready(pixel_unshuffle(x2, 4))
    assert y2.shape == (1, 32, 6, 10), y2.shape
    assert bool(jnp.array_equal(y2, pixel_unshuffle_ref(x2, 4)))

    # Force the multi-stripe path with a masked ragged last stripe via a tiny
    # VMEM budget: (1, 3, 40, 256), r=2 -> (1, 12, 20, 128), th=8 (20 = 8+8+4).
    x3 = jax.random.normal(k3, (1, 3, 40, 256), jnp.float32)
    y3 = jax.block_until_ready(pixel_unshuffle(x3, 2, vmem_budget_bytes=256 << 10))
    assert y3.shape == (1, 12, 20, 128), y3.shape
    assert bool(jnp.array_equal(y3, pixel_unshuffle_ref(x3, 2)))

    # bfloat16 (dtype-aware sublane granularity): (2, 2, 32, 32) -> (2, 8, 16, 16)
    x4 = jax.random.normal(k1, (2, 2, 32, 32), jnp.bfloat16)
    y4 = jax.block_until_ready(pixel_unshuffle(x4, 2))
    assert y4.shape == (2, 8, 16, 16), y4.shape
    assert bool(jnp.array_equal(y4, pixel_unshuffle_ref(x4, 2)))

    print("KERNEL_OK")
</pallas_src>

<mosaic_0001>
module attributes {stable_mosaic.version = 11 : i64} {
  func.func @_pixel_unshuffle_kernel(%arg0: i32, %arg1: i32, %arg2: memref<8x16x16xf32, #tpu.memory_space<vmem>>, %arg3: memref<8x4x8x8xf32, #tpu.memory_space<vmem>>, %arg4: memref<8x16x8xf32, #tpu.memory_space<vmem>>) attributes {dimension_semantics = [#tpu.dimension_semantics<parallel>, #tpu.dimension_semantics<parallel>], iteration_bounds = array<i64: 1, 1>, scalar_prefetch = 0 : i64, scratch_operands = 1 : i64, tpu.core_type = #tpu.core_type<tc>, window_params = [{transform_indices = @transform_0, window_bounds = array<i64: 8, 16, 16>}, {transform_indices = @transform_1, window_bounds = array<i64: 8, 4, 8, 8>}]} {
    %c0 = arith.constant 0 : index
    %c0_0 = arith.constant 0 : index
    %c0_1 = arith.constant 0 : index
    %0 = tpu.strided_load %arg2[%c0, %c0_0, %c0_1] {strides = array<i32: 1, 2, 1>} : memref<8x16x16xf32, #tpu.memory_space<vmem>>, vector<8x8x16xf32>
    %1 = tpu.transpose %0, [0, 2, 1] : vector<8x8x16xf32> -> vector<8x16x8xf32>
    %c0_2 = arith.constant 0 : index
    %c0_3 = arith.constant 0 : index
    %c0_4 = arith.constant 0 : index
    %2 = vector.load %arg4[%c0_2, %c0_3, %c0_4] : memref<8x16x8xf32, #tpu.memory_space<vmem>>, vector<8x16x8xf32>
    tpu.vector_store %arg4[%c0_2, %c0_3, %c0_4], %1 {strides = array<i32>} : memref<8x16x8xf32, #tpu.memory_space<vmem>>, vector<8x16x8xf32>,
    %c0_5 = arith.constant 0 : index
    %c0_6 = arith.constant 0 : index
    %c0_7 = arith.constant 0 : index
    %3 = tpu.strided_load %arg4[%c0_5, %c0_6, %c0_7] {strides = array<i32: 1, 2, 1>} : memref<8x16x8xf32, #tpu.memory_space<vmem>>, vector<8x8x8xf32>
    %4 = tpu.transpose %3, [0, 2, 1] : vector<8x8x8xf32> -> vector<8x8x8xf32>
    %c0_8 = arith.constant 0 : index
    %c0_9 = arith.constant 0 : index
    %c0_10 = arith.constant 0 : index
    %c0_11 = arith.constant 0 : index
    %5 = vector.load %arg3[%c0_8, %c0_9, %c0_10, %c0_11] : memref<8x4x8x8xf32, #tpu.memory_space<vmem>>, vector<8x1x8x8xf32>
    %6 = vector.shape_cast %5 : vector<8x1x8x8xf32> to vector<8x8x8xf32>
    %7 = vector.shape_cast %4 : vector<8x8x8xf32> to vector<8x1x8x8xf32>
    tpu.vector_store %arg3[%c0_8, %c0_9, %c0_10, %c0_11], %7 {strides = array<i32>} : memref<8x4x8x8xf32, #tpu.memory_space<vmem>>, vector<8x1x8x8xf32>,
    %c0_12 = arith.constant 0 : index
    %c1 = arith.constant 1 : index
    %c0_13 = arith.constant 0 : index
    %8 = tpu.strided_load %arg4[%c0_12, %c1, %c0_13] {strides = array<i32: 1, 2, 1>} : memref<8x16x8xf32, #tpu.memory_space<vmem>>, vector<8x8x8xf32>
    %9 = tpu.transpose %8, [0, 2, 1] : vector<8x8x8xf32> -> vector<8x8x8xf32>
    %c0_14 = arith.constant 0 : index
    %c1_15 = arith.constant 1 : index
    %c0_16 = arith.constant 0 : index
    %c0_17 = arith.constant 0 : index
    %10 = vector.load %arg3[%c0_14, %c1_15, %c0_16, %c0_17] : memref<8x4x8x8xf32, #tpu.memory_space<vmem>>, vector<8x1x8x8xf32>
    %11 = vector.shape_cast %10 : vector<8x1x8x8xf32> to vector<8x8x8xf32>
    %12 = vector.shape_cast %9 : vector<8x8x8xf32> to vector<8x1x8x8xf32>
    tpu.vector_store %arg3[%c0_14, %c1_15, %c0_16, %c0_17], %12 {strides = array<i32>} : memref<8x4x8x8xf32, #tpu.memory_space<vmem>>, vector<8x1x8x8xf32>,
    %c0_18 = arith.constant 0 : index
    %c1_19 = arith.constant 1 : index
    %c0_20 = arith.constant 0 : index
    %13 = tpu.strided_load %arg2[%c0_18, %c1_19, %c0_20] {strides = array<i32: 1, 2, 1>} : memref<8x16x16xf32, #tpu.memory_space<vmem>>, vector<8x8x16xf32>
    %14 = tpu.transpose %13, [0, 2, 1] : vector<8x8x16xf32> -> vector<8x16x8xf32>
    %c0_21 = arith.constant 0 : index
    %c0_22 = arith.constant 0 : index
    %c0_23 = arith.constant 0 : index
    %15 = vector.load %arg4[%c0_21, %c0_22, %c0_23] : memref<8x16x8xf32, #tpu.memory_space<vmem>>, vector<8x16x8xf32>
    tpu.vector_store %arg4[%c0_21, %c0_22, %c0_23], %14 {strides = array<i32>} : memref<8x16x8xf32, #tpu.memory_space<vmem>>, vector<8x16x8xf32>,
    %c0_24 = arith.constant 0 : index
    %c0_25 = arith.constant 0 : index
    %c0_26 = arith.constant 0 : index
    %16 = tpu.strided_load %arg4[%c0_24, %c0_25, %c0_26] {strides = array<i32: 1, 2, 1>} : memref<8x16x8xf32, #tpu.memory_space<vmem>>, vector<8x8x8xf32>
    %17 = tpu.transpose %16, [0, 2, 1] : vector<8x8x8xf32> -> vector<8x8x8xf32>
    %c0_27 = arith.constant 0 : index
    %c2 = arith.constant 2 : index
    %c0_28 = arith.constant 0 : index
    %c0_29 = arith.constant 0 : index
    %18 = vector.load %arg3[%c0_27, %c2, %c0_28, %c0_29] : memref<8x4x8x8xf32, #tpu.memory_space<vmem>>, vector<8x1x8x8xf32>
    %19 = vector.shape_cast %18 : vector<8x1x8x8xf32> to vector<8x8x8xf32>
    %20 = vector.shape_cast %17 : vector<8x8x8xf32> to vector<8x1x8x8xf32>
    tpu.vector_store %arg3[%c0_27, %c2, %c0_28, %c0_29], %20 {strides = array<i32>} : memref<8x4x8x8xf32, #tpu.memory_space<vmem>>, vector<8x1x8x8xf32>,
    %c0_30 = arith.constant 0 : index
    %c1_31 = arith.constant 1 : index
    %c0_32 = arith.constant 0 : index
    %21 = tpu.strided_load %arg4[%c0_30, %c1_31, %c0_32] {strides = array<i32: 1, 2, 1>} : memref<8x16x8xf32, #tpu.memory_space<vmem>>, vector<8x8x8xf32>
    %22 = tpu.transpose %21, [0, 2, 1] : vector<8x8x8xf32> -> vector<8x8x8xf32>
    %c0_33 = arith.constant 0 : index
    %c3 = arith.constant 3 : index
    %c0_34 = arith.constant 0 : index
    %c0_35 = arith.constant 0 : index
    %23 = vector.load %arg3[%c0_33, %c3, %c0_34, %c0_35] : memref<8x4x8x8xf32, #tpu.memory_space<vmem>>, vector<8x1x8x8xf32>
    %24 = vector.shape_cast %23 : vector<8x1x8x8xf32> to vector<8x8x8xf32>
    %25 = vector.shape_cast %22 : vector<8x8x8xf32> to vector<8x1x8x8xf32>
    tpu.vector_store %arg3[%c0_33, %c3, %c0_34, %c0_35], %25 {strides = array<i32>} : memref<8x4x8x8xf32, #tpu.memory_space<vmem>>, vector<8x1x8x8xf32>,
    return
  }
  func.func @transform_0(%arg0: i32, %arg1: i32) -> (i32, i32, i32) {
    %c0_i32 = arith.constant 0 : i32
    %c0_i32_0 = arith.constant 0 : i32
    return %arg0, %arg1, %c0_i32 : i32, i32, i32
  }
  func.func @transform_1(%arg0: i32, %arg1: i32) -> (i32, i32, i32, i32) {
    %c0_i32 = arith.constant 0 : i32
    %c0_i32_0 = arith.constant 0 : i32
    %c0_i32_1 = arith.constant 0 : i32
    return %arg0, %c0_i32, %arg1, %c0_i32_0 : i32, i32, i32, i32
  }
}

</mosaic_0001>

<llo_original>
// kernel: tpu_custom_call.1
$region0: #{tpu_custom_call.1}
  #allocation0 [shape = 'u32[]', space=smem, size = 0x4, offset = 0x4, fixed_abs, tag = 'smem constant byte address 0x4 - core index']
  #allocation1 [shape = 'u32[144,128]{1,0:T(1,128)}', space=vmem, size = 0x12000, scoped, tag = 'internal scratch']
  #allocation2 [shape = 'f32[8,16,8]{2,1,0:T(8,128)}', space=vmem, size = 0x10000, scoped, tag = 'scratch operand']
  %s0 = inlined_call_operand.hbm [shape: f32[8,16,16], index: 0, kind: input, shape index: {}]
  %s1 = inlined_call_operand.hbm [shape: f32[8,4,8,8], index: 1, kind: output, shape index: {}]
  %s2 = sld [smem:[#allocation0]]
  $region18: #{tpu_custom_call.1} parent=0
    _
  %s4 = ssub.s32 1, %s2
  %s5 = scalar_select 0, %s4, %s2
  $region1: #{tpu_custom_call.1} parent=0
    #allocation3 [shape = 'u8[65536]{0}', space=vmem, size = 0x10000, scoped, tag = 'input window, operand 0, single buffered']
    #allocation4 [shape = 's32[1]{0}', space=sflag, size = 0x4, scoped, tag = 'scoped memory for tpu_custom_call.1']
    #allocation5 [shape = 's32[1]{0}', space=sflag, size = 0x4, scoped, tag = 'scoped memory for tpu_custom_call.1']
    #allocation6 [shape = 'u8[131072]{0}', space=vmem, size = 0x20000, scoped, tag = 'output window, operand 0, single buffered']
    %6 = vsyncpa [#allocation4], 0
    %7 = vsyncpa [#allocation5], 0
    // Predicated region
    $region2: #{tpu_custom_call.1} parent=1 // pred_check
      _
    $region3: #{tpu_custom_call.1} parent=1 // pred_check_branch
      %9 = sbr.rel (0) target = $region5
    $region4: #{tpu_custom_call.1} parent=1 // pred_region
      %s11 = ssub.s32 2048, 2048
      %12 = vsyncadd [#allocation4], %s11
      %s13 = sshll.u32 [#allocation3], 4
      %s14 = int_to_ptr.vmem [resolvable:$true] %s13
      %19 = dma.hbm_to_vmem [thread:$0]  %s0, 2048, %s14, [#allocation4], 128, 128, 8
    $region5: #{tpu_custom_call.1} parent=1 // pred_fallthru
      _
    // Predicated region
    $region6: #{tpu_custom_call.1} parent=1 // pred_check
      _
    $region7: #{tpu_custom_call.1} parent=1 // pred_check_branch
      %21 = sbr.rel (0) target = $region9
    $region8: #{tpu_custom_call.1} parent=1 // pred_region
      %22 = dma.done [#allocation4], 2048
    $region9: #{tpu_custom_call.1} parent=1 // pred_fallthru
      _
    %v23 = vld [vmem:[#allocation3] ss:$2 sm:$0xff]
    %s24 = scalar_lea.vmem [#allocation3], 16
    %v25 = vld [vmem:[%s24] ss:$2 sm:$0xff]
    %s26 = scalar_lea.vmem [#allocation3], 32
    %v27 = vld [vmem:[%s26] ss:$2 sm:$0xff]
    %s28 = scalar_lea.vmem [#allocation3], 48
    %v29 = vld [vmem:[%s28] ss:$2 sm:$0xff]
    %s30 = scalar_lea.vmem [#allocation3], 64
    %v31 = vld [vmem:[%s30] ss:$2 sm:$0xff]
    %s32 = scalar_lea.vmem [#allocation3], 80
    %v33 = vld [vmem:[%s32] ss:$2 sm:$0xff]
    %s34 = scalar_lea.vmem [#allocation3], 96
    %v35 = vld [vmem:[%s34] ss:$2 sm:$0xff]
    %s36 = scalar_lea.vmem [#allocation3], 112
    %v37 = vld [vmem:[%s36] ss:$2 sm:$0xff]
    %38 = vxpose.xlu0.b32.start [1/16] %v23, 128
    %39 = vxpose.xlu0.b32.cont [2/16] 0.0, 128
    %40 = vxpose.xlu0.b32.cont [3/16] 0.0, 128
    %41 = vxpose.xlu0.b32.cont [4/16] 0.0, 128
    %42 = vxpose.xlu0.b32.cont [5/16] 0.0, 128
    %43 = vxpose.xlu0.b32.cont [6/16] 0.0, 128
    %44 = vxpose.xlu0.b32.cont [7/16] 0.0, 128
    %45 = vxpose.xlu0.b32.cont [8/16] 0.0, 128
    %46 = vxpose.xlu0.b32.cont [9/16] 0.0, 128
    %47 = vxpose.xlu0.b32.cont [10/16] 0.0, 128
    %48 = vxpose.xlu0.b32.cont [11/16] 0.0, 128
    %49 = vxpose.xlu0.b32.cont [12/16] 0.0, 128
    %50 = vxpose.xlu0.b32.cont [13/16] 0.0, 128
    %51 = vxpose.xlu0.b32.cont [14/16] 0.0, 128
    %52 = vxpose.xlu0.b32.cont [15/16] 0.0, 128
    %53 = vxpose.xlu0.b32.end [16/16] 0.0, 128
    %v54 = vpop.trf.xlu0
    %v55 = vpop.trf.xlu0
    %v56 = vpop.trf.xlu0
    %v57 = vpop.trf.xlu0
    %v58 = vpop.trf.xlu0
    %v59 = vpop.trf.xlu0
    %v60 = vpop.trf.xlu0
    %v61 = vpop.trf.xlu0
    %v62 = vpop.trf.xlu0
    %v63 = vpop.trf.xlu0
    %v64 = vpop.trf.xlu0
    %v65 = vpop.trf.xlu0
    %v66 = vpop.trf.xlu0
    %v67 = vpop.trf.xlu0
    %v68 = vpop.trf.xlu0
    %v69 = vpop.trf.xlu0
    %70 = vxpose.xlu0.b32.start [1/16] %v25, 128
    %71 = vxpose.xlu0.b32.cont [2/16] 0.0, 128
    %72 = vxpose.xlu0.b32.cont [3/16] 0.0, 128
    %73 = vxpose.xlu0.b32.cont [4/16] 0.0, 128
    %74 = vxpose.xlu0.b32.cont [5/16] 0.0, 128
    %75 = vxpose.xlu0.b32.cont [6/16] 0.0, 128
    %76 = vxpose.xlu0.b32.cont [7/16] 0.0, 128
    %77 = vxpose.xlu0.b32.cont [8/16] 0.0, 128
    %78 = vxpose.xlu0.b32.cont [9/16] 0.0, 128
    %79 = vxpose.xlu0.b32.cont [10/16] 0.0, 128
    %80 = vxpose.xlu0.b32.cont [11/16] 0.0, 128
    %81 = vxpose.xlu0.b32.cont [12/16] 0.0, 128
    %82 = vxpose.xlu0.b32.cont [13/16] 0.0, 128
    %83 = vxpose.xlu0.b32.cont [14/16] 0.0, 128
    %84 = vxpose.xlu0.b32.cont [15/16] 0.0, 128
    %85 = vxpose.xlu0.b32.end [16/16] 0.0, 128
    %v86 = vpop.trf.xlu0
    %v87 = vpop.trf.xlu0
    %v88 = vpop.trf.xlu0
    %v89 = vpop.trf.xlu0
    %v90 = vpop.trf.xlu0
    %v91 = vpop.trf.xlu0
    %v92 = vpop.trf.xlu0
    %v93 = vpop.trf.xlu0
    %v94 = vpop.trf.xlu0
    %v95 = vpop.trf.xlu0
    %v96 = vpop.trf.xlu0
    %v97 = vpop.trf.xlu0
    %v98 = vpop.trf.xlu0
    %v99 = vpop.trf.xlu0
    %v100 = vpop.trf.xlu0
    %v101 = vpop.trf.xlu0
    %102 = vxpose.xlu0.b32.start [1/16] %v27, 128
    %103 = vxpose.xlu0.b32.cont [2/16] 0.0, 128
    %104 = vxpose.xlu0.b32.cont [3/16] 0.0, 128
    %105 = vxpose.xlu0.b32.cont [4/16] 0.0, 128
    %106 = vxpose.xlu0.b32.cont [5/16] 0.0, 128
    %107 = vxpose.xlu0.b32.cont [6/16] 0.0, 128
    %108 = vxpose.xlu0.b32.cont [7/16] 0.0, 128
    %109 = vxpose.xlu0.b32.cont [8/16] 0.0, 128
    %110 = vxpose.xlu0.b32.cont [9/16] 0.0, 128
    %111 = vxpose.xlu0.b32.cont [10/16] 0.0, 128
    %112 = vxpose.xlu0.b32.cont [11/16] 0.0, 128
    %113 = vxpose.xlu0.b32.cont [12/16] 0.0, 128
    %114 = vxpose.xlu0.b32.cont [13/16] 0.0, 128
    %115 = vxpose.xlu0.b32.cont [14/16] 0.0, 128
    %116 = vxpose.xlu0.b32.cont [15/16] 0.0, 128
    %117 = vxpose.xlu0.b32.end [16/16] 0.0, 128
    %v118 = vpop.trf.xlu0
    %v119 = vpop.trf.xlu0
    %v120 = vpop.trf.xlu0
    %v121 = vpop.trf.xlu0
    %v122 = vpop.trf.xlu0
    %v123 = vpop.trf.xlu0
    %v124 = vpop.trf.xlu0
    %v125 = vpop.trf.xlu0
    %v126 = vpop.trf.xlu0
    %v127 = vpop.trf.xlu0
    %v128 = vpop.trf.xlu0
    %v129 = vpop.trf.xlu0
    %v130 = vpop.trf.xlu0
    %v131 = vpop.trf.xlu0
    %v132 = vpop.trf.xlu0
    %v133 = vpop.trf.xlu0
    %134 = vxpose.xlu0.b32.start [1/16] %v29, 128
    %135 = vxpose.xlu0.b32.cont [2/16] 0.0, 128
    %136 = vxpose.xlu0.b32.cont [3/16] 0.0, 128
    %137 = vxpose.xlu0.b32.cont [4/16] 0.0, 128
    %138 = vxpose.xlu0.b32.cont [5/16] 0.0, 128
    %139 = vxpose.xlu0.b32.cont [6/16] 0.0, 128
    %140 = vxpose.xlu0.b32.cont [7/16] 0.0, 128
    %141 = vxpose.xlu0.b32.cont [8/16] 0.0, 128
    %142 = vxpose.xlu0.b32.cont [9/16] 0.0, 128
    %143 = vxpose.xlu0.b32.cont [10/16] 0.0, 128
    %144 = vxpose.xlu0.b32.cont [11/16] 0.0, 128
    %145 = vxpose.xlu0.b32.cont [12/16] 0.0, 128
    %146 = vxpose.xlu0.b32.cont [13/16] 0.0, 128
    %147 = vxpose.xlu0.b32.cont [14/16] 0.0, 128
    %148 = vxpose.xlu0.b32.cont [15/16] 0.0, 128
    %149 = vxpose.xlu0.b32.end [16/16] 0.0, 128
    %v150 = vpop.trf.xlu0
    %v151 = vpop.trf.xlu0
    %v152 = vpop.trf.xlu0
    %v153 = vpop.trf.xlu0
    %v154 = vpop.trf.xlu0
    %v155 = vpop.trf.xlu0
    %v156 = vpop.trf.xlu0
    %v157 = vpop.trf.xlu0
    %v158 = vpop.trf.xlu0
    %v159 = vpop.trf.xlu0
    %v160 = vpop.trf.xlu0
    %v161 = vpop.trf.xlu0
    %v162 = vpop.trf.xlu0
    %v163 = vpop.trf.xlu0
    %v164 = vpop.trf.xlu0
    %v165 = vpop.trf.xlu0
    %166 = vxpose.xlu0.b32.start [1/16] %v31, 128
    %167 = vxpose.xlu0.b32.cont [2/16] 0.0, 128
    %168 = vxpose.xlu0.b32.cont [3/16] 0.0, 128
    %169 = vxpose.xlu0.b32.cont [4/16] 0.0, 128
    %170 = vxpose.xlu0.b32.cont [5/16] 0.0, 128
    %171 = vxpose.xlu0.b32.cont [6/16] 0.0, 128
    %172 = vxpose.xlu0.b32.cont [7/16] 0.0, 128
    %173 = vxpose.xlu0.b32.cont [8/16] 0.0, 128
    %174 = vxpose.xlu0.b32.cont [9/16] 0.0, 128
    %175 = vxpose.xlu0.b32.cont [10/16] 0.0, 128
    %176 = vxpose.xlu0.b32.cont [11/16] 0.0, 128
    %177 = vxpose.xlu0.b32.cont [12/16] 0.0, 128
    %178 = vxpose.xlu0.b32.cont [13/16] 0.0, 128
    %179 = vxpose.xlu0.b32.cont [14/16] 0.0, 128
    %180 = vxpose.xlu0.b32.cont [15/16] 0.0, 128
    %181 = vxpose.xlu0.b32.end [16/16] 0.0, 128
    %v182 = vpop.trf.xlu0
    %v183 = vpop.trf.xlu0
    %v184 = vpop.trf.xlu0
    %v185 = vpop.trf.xlu0
    %v186 = vpop.trf.xlu0
    %v187 = vpop.trf.xlu0
    %v188 = vpop.trf.xlu0
    %v189 = vpop.trf.xlu0
    %v190 = vpop.trf.xlu0
    %v191 = vpop.trf.xlu0
    %v192 = vpop.trf.xlu0
    %v193 = vpop.trf.xlu0
    %v194 = vpop.trf.xlu0
    %v195 = vpop.trf.xlu0
    %v196 = vpop.trf.xlu0
    %v197 = vpop.trf.xlu0
    %198 = vxpose.xlu0.b32.start [1/16] %v33, 128
    %199 = vxpose.xlu0.b32.cont [2/16] 0.0, 128
    %200 = vxpose.xlu0.b32.cont [3/16] 0.0, 128
    %201 = vxpose.xlu0.b32.cont [4/16] 0.0, 128
    %202 = vxpose.xlu0.b32.cont [5/16] 0.0, 128
    %203 = vxpose.xlu0.b32.cont [6/16] 0.0, 128
    %204 = vxpose.xlu0.b32.cont [7/16] 0.0, 128
    %205 = vxpose.xlu0.b32.cont [8/16] 0.0, 128
    %206 = vxpose.xlu0.b32.cont [9/16] 0.0, 128
    %207 = vxpose.xlu0.b32.cont [10/16] 0.0, 128
    %208 = vxpose.xlu0.b32.cont [11/16] 0.0, 128
    %209 = vxpose.xlu0.b32.cont [12/16] 0.0, 128
    %210 = vxpose.xlu0.b32.cont [13/16] 0.0, 128
    %211 = vxpose.xlu0.b32.cont [14/16] 0.0, 128
    %212 = vxpose.xlu0.b32.cont [15/16] 0.0, 128
    %213 = vxpose.xlu0.b32.end [16/16] 0.0, 128
    %v214 = vpop.trf.xlu0
    %v215 = vpop.trf.xlu0
    %v216 = vpop.trf.xlu0
    %v217 = vpop.trf.xlu0
    %v218 = vpop.trf.xlu0
    %v219 = vpop.trf.xlu0
    %v220 = vpop.trf.xlu0
    %v221 = vpop.trf.xlu0
    %v222 = vpop.trf.xlu0
    %v223 = vpop.trf.xlu0
    %v224 = vpop.trf.xlu0
    %v225 = vpop.trf.xlu0
    %v226 = vpop.trf.xlu0
    %v227 = vpop.trf.xlu0
    %v228 = vpop.trf.xlu0
    %v229 = vpop.trf.xlu0
    %230 = vxpose.xlu0.b32.start [1/16] %v35, 128
    %231 = vxpose.xlu0.b32.cont [2/16] 0.0, 128
    %232 = vxpose.xlu0.b32.cont [3/16] 0.0, 128
    %233 = vxpose.xlu0.b32.cont [4/16] 0.0, 128
    %234 = vxpose.xlu0.b32.cont [5/16] 0.0, 128
    %235 = vxpose.xlu0.b32.cont [6/16] 0.0, 128
    %236 = vxpose.xlu0.b32.cont [7/16] 0.0, 128
    %237 = vxpose.xlu0.b32.cont [8/16] 0.0, 128
    %238 = vxpose.xlu0.b32.cont [9/16] 0.0, 128
    %239 = vxpose.xlu0.b32.cont [10/16] 0.0, 128
    %240 = vxpose.xlu0.b32.cont [11/16] 0.0, 128
    %241 = vxpose.xlu0.b32.cont [12/16] 0.0, 128
    %242 = vxpose.xlu0.b32.cont [13/16] 0.0, 128
    %243 = vxpose.xlu0.b32.cont [14/16] 0.0, 128
    %244 = vxpose.xlu0.b32.cont [15/16] 0.0, 128
    %245 = vxpose.xlu0.b32.end [16/16] 0.0, 128
    %v246 = vpop.trf.xlu0
    %v247 = vpop.trf.xlu0
    %v248 = vpop.trf.xlu0
    %v249 = vpop.trf.xlu0
    %v250 = vpop.trf.xlu0
    %v251 = vpop.trf.xlu0
    %v252 = vpop.trf.xlu0
    %v253 = vpop.trf.xlu0
    %v254 = vpop.trf.xlu0
    %v255 = vpop.trf.xlu0
    %v256 = vpop.trf.xlu0
    %v257 = vpop.trf.xlu0
    %v258 = vpop.trf.xlu0
    %v259 = vpop.trf.xlu0
    %v260 = vpop.trf.xlu0
    %v261 = vpop.trf.xlu0
    %262 = vxpose.xlu0.b32.start [1/16] %v37, 128
    %263 = vxpose.xlu0.b32.cont [2/16] 0.0, 128
    %264 = vxpose.xlu0.b32.cont [3/16] 0.0, 128
    %265 = vxpose.xlu0.b32.cont [4/16] 0.0, 128
    %266 = vxpose.xlu0.b32.cont [5/16] 0.0, 128
    %267 = vxpose.xlu0.b32.cont [6/16] 0.0, 128
    %268 = vxpose.xlu0.b32.cont [7/16] 0.0, 128
    %269 = vxpose.xlu0.b32.cont [8/16] 0.0, 128
    %270 = vxpose.xlu0.b32.cont [9/16] 0.0, 128
    %271 = vxpose.xlu0.b32.cont [10/16] 0.0, 128
    %272 = vxpose.xlu0.b32.cont [11/16] 0.0, 128
    %273 = vxpose.xlu0.b32.cont [12/16] 0.0, 128
    %274 = vxpose.xlu0.b32.cont [13/16] 0.0, 128
    %275 = vxpose.xlu0.b32.cont [14/16] 0.0, 128
    %276 = vxpose.xlu0.b32.cont [15/16] 0.0, 128
    %277 = vxpose.xlu0.b32.end [16/16] 0.0, 128
    %v278 = vpop.trf.xlu0
    %v279 = vpop.trf.xlu0
    %v280 = vpop.trf.xlu0
    %v281 = vpop.trf.xlu0
    %v282 = vpop.trf.xlu0
    %v283 = vpop.trf.xlu0
    %v284 = vpop.trf.xlu0
    %v285 = vpop.trf.xlu0
    %v286 = vpop.trf.xlu0
    %v287 = vpop.trf.xlu0
    %v288 = vpop.trf.xlu0
    %v289 = vpop.trf.xlu0
    %v290 = vpop.trf.xlu0
    %v291 = vpop.trf.xlu0
    %v292 = vpop.trf.xlu0
    %v293 = vpop.trf.xlu0
    %vm294 = vcmask 64512
    %295 = vst.msk [vmem:[#allocation2] sm:$0xff] %vm294, %v54
    %296 = vst.msk [vmem:[#allocation2 + $0x8] sm:$0xff] %vm294, %v55
    %297 = vst.msk [vmem:[#allocation2 + $0x10] sm:$0xff] %vm294, %v86
    %298 = vst.msk [vmem:[#allocation2 + $0x18] sm:$0xff] %vm294, %v87
    %299 = vst.msk [vmem:[#allocation2 + $0x20] sm:$0xff] %vm294, %v118
    %300 = vst.msk [vmem:[#allocation2 + $0x28] sm:$0xff] %vm294, %v119
    %301 = vst.msk [vmem:[#allocation2 + $0x30] sm:$0xff] %vm294, %v150
    %302 = vst.msk [vmem:[#allocation2 + $0x38] sm:$0xff] %vm294, %v151
    %303 = vst.msk [vmem:[#allocation2 + $0x40] sm:$0xff] %vm294, %v182
    %304 = vst.msk [vmem:[#allocation2 + $0x48] sm:$0xff] %vm294, %v183
    %305 = vst.msk [vmem:[#allocation2 + $0x50] sm:$0xff] %vm294, %v214
    %306 = vst.msk [vmem:[#allocation2 + $0x58] sm:$0xff] %vm294, %v215
    %307 = vst.msk [vmem:[#allocation2 + $0x60] sm:$0xff] %vm294, %v246
    %308 = vst.msk [vmem:[#allocation2 + $0x68] sm:$0xff] %vm294, %v247
    %309 = vst.msk [vmem:[#allocation2 + $0x70] sm:$0xff] %vm294, %v278
    %310 = vst.msk [vmem:[#allocation2 + $0x78] sm:$0xff] %vm294, %v279
    %v311 = vld [vmem:[#allocation2] ss:$2 sm:$0xff]
    %s312 = scalar_lea.vmem [#allocation2], 16
    %v313 = vld [vmem:[%s312] ss:$2 sm:$0xff]
    %s314 = scalar_lea.vmem [#allocation2], 32
    %v315 = vld [vmem:[%s314] ss:$2 sm:$0xff]
    %s316 = scalar_lea.vmem [#allocation2], 48
    %v317 = vld [vmem:[%s316] ss:$2 sm:$0xff]
    %s318 = scalar_lea.vmem [#allocation2], 64
    %v319 = vld [vmem:[%s318] ss:$2 sm:$0xff]
    %s320 = scalar_lea.vmem [#allocation2], 80
    %v321 = vld [vmem:[%s320] ss:$2 sm:$0xff]
    %s322 = scalar_lea.vmem [#allocation2], 96
    %v323 = vld [vmem:[%s322] ss:$2 sm:$0xff]
    %s324 = scalar_lea.vmem [#allocation2], 112
    %v325 = vld [vmem:[%s324] ss:$2 sm:$0xff]
    %326 = vxpose.xlu0.b32.start [1/16] %v311, 128
    %327 = vxpose.xlu0.b32.cont [2/16] 0.0, 128
    %328 = vxpose.xlu0.b32.cont [3/16] 0.0, 128
    %329 = vxpose.xlu0.b32.cont [4/16] 0.0, 128
    %330 = vxpose.xlu0.b32.cont [5/16] 0.0, 128
    %331 = vxpose.xlu0.b32.cont [6/16] 0.0, 128
    %332 = vxpose.xlu0.b32.cont [7/16] 0.0, 128
    %333 = vxpose.xlu0.b32.cont [8/16] 0.0, 128
    %334 = vxpose.xlu0.b32.cont [9/16] 0.0, 128
    %335 = vxpose.xlu0.b32.cont [10/16] 0.0, 128
    %336 = vxpose.xlu0.b32.cont [11/16] 0.0, 128
    %337 = vxpose.xlu0.b32.cont [12/16] 0.0, 128
    %338 = vxpose.xlu0.b32.cont [13/16] 0.0, 128
    %339 = vxpose.xlu0.b32.cont [14/16] 0.0, 128
    %340 = vxpose.xlu0.b32.cont [15/16] 0.0, 128
    %341 = vxpose.xlu0.b32.end [16/16] 0.0, 128
    %v342 = vpop.trf.xlu0
    %v343 = vpop.trf.xlu0
    %v344 = vpop.trf.xlu0
    %v345 = vpop.trf.xlu0
    %v346 = vpop.trf.xlu0
    %v347 = vpop.trf.xlu0
    %v348 = vpop.trf.xlu0
    %v349 = vpop.trf.xlu0
    %v350 = vpop.trf.xlu0
    %v351 = vpop.trf.xlu0
    %v352 = vpop.trf.xlu0
    %v353 = vpop.trf.xlu0
    %v354 = vpop.trf.xlu0
    %v355 = vpop.trf.xlu0
    %v356 = vpop.trf.xlu0
    %v357 = vpop.trf.xlu0
    %358 = vxpose.xlu0.b32.start [1/16] %v313, 128
    %359 = vxpose.xlu0.b32.cont [2/16] 0.0, 128
    %360 = vxpose.xlu0.b32.cont [3/16] 0.0, 128
    %361 = vxpose.xlu0.b32.cont [4/16] 0.0, 128
    %362 = vxpose.xlu0.b32.cont [5/16] 0.0, 128
    %363 = vxpose.xlu0.b32.cont [6/16] 0.0, 128
    %364 = vxpose.xlu0.b32.cont [7/16] 0.0, 128
    %365 = vxpose.xlu0.b32.cont [8/16] 0.0, 128
    %366 = vxpose.xlu0.b32.cont [9/16] 0.0, 128
    %367 = vxpose.xlu0.b32.cont [10/16] 0.0, 128
    %368 = vxpose.xlu0.b32.cont [11/16] 0.0, 128
    %369 = vxpose.xlu0.b32.cont [12/16] 0.0, 128
    %370 = vxpose.xlu0.b32.cont [13/16] 0.0, 128
    %371 = vxpose.xlu0.b32.cont [14/16] 0.0, 128
    %372 = vxpose.xlu0.b32.cont [15/16] 0.0, 128
    %373 = vxpose.xlu0.b32.end [16/16] 0.0, 128
    %v374 = vpop.trf.xlu0
    %v375 = vpop.trf.xlu0
    %v376 = vpop.trf.xlu0
    %v377 = vpop.trf.xlu0
    %v378 = vpop.trf.xlu0
    %v379 = vpop.trf.xlu0
    %v380 = vpop.trf.xlu0
    %v381 = vpop.trf.xlu0
    %v382 = vpop.trf.xlu0
    %v383 = vpop.trf.xlu0
    %v384 = vpop.trf.xlu0
    %v385 = vpop.trf.xlu0
    %v386 = vpop.trf.xlu0
    %v387 = vpop.trf.xlu0
    %v388 = vpop.trf.xlu0
    %v389 = vpop.trf.xlu0
    %390 = vxpose.xlu0.b32.start [1/16] %v315, 128
    %391 = vxpose.xlu0.b32.cont [2/16] 0.0, 128
    %392 = vxpose.xlu0.b32.cont [3/16] 0.0, 128
    %393 = vxpose.xlu0.b32.cont [4/16] 0.0, 128
    %394 = vxpose.xlu0.b32.cont [5/16] 0.0, 128
    %395 = vxpose.xlu0.b32.cont [6/16] 0.0, 128
    %396 = vxpose.xlu0.b32.cont [7/16] 0.0, 128
    %397 = vxpose.xlu0.b32.cont [8/16] 0.0, 128
    %398 = vxpose.xlu0.b32.cont [9/16] 0.0, 128
    %399 = vxpose.xlu0.b32.cont [10/16] 0.0, 128
    %400 = vxpose.xlu0.b32.cont [11/16] 0.0, 128
    %401 = vxpose.xlu0.b32.cont [12/16] 0.0, 128
    %402 = vxpose.xlu0.b32.cont [13/16] 0.0, 128
    %403 = vxpose.xlu0.b32.cont [14/16] 0.0, 128
    %404 = vxpose.xlu0.b32.cont [15/16] 0.0, 128
    %405 = vxpose.xlu0.b32.end [16/16] 0.0, 128
    %v406 = vpop.trf.xlu0
    %v407 = vpop.trf.xlu0
    %v408 = vpop.trf.xlu0
    %v409 = vpop.trf.xlu0
    %v410 = vpop.trf.xlu0
    %v411 = vpop.trf.xlu0
    %v412 = vpop.trf.xlu0
    %v413 = vpop.trf.xlu0
    %v414 = vpop.trf.xlu0
    %v415 = vpop.trf.xlu0
    %v416 = vpop.trf.xlu0
    %v417 = vpop.trf.xlu0
    %v418 = vpop.trf.xlu0
    %v419 = vpop.trf.xlu0
    %v420 = vpop.trf.xlu0
    %v421 = vpop.trf.xlu0
    %422 = vxpose.xlu0.b32.start [1/16] %v317, 128
    %423 = vxpose.xlu0.b32.cont [2/16] 0.0, 128
    %424 = vxpose.xlu0.b32.cont [3/16] 0.0, 128
    %425 = vxpose.xlu0.b32.cont [4/16] 0.0, 128
    %426 = vxpose.xlu0.b32.cont [5/16] 0.0, 128
    %427 = vxpose.xlu0.b32.cont [6/16] 0.0, 128
    %428 = vxpose.xlu0.b32.cont [7/16] 0.0, 128
    %429 = vxpose.xlu0.b32.cont [8/16] 0.0, 128
    %430 = vxpose.xlu0.b32.cont [9/16] 0.0, 128
    %431 = vxpose.xlu0.b32.cont [10/16] 0.0, 128
    %432 = vxpose.xlu0.b32.cont [11/16] 0.0, 128
    %433 = vxpose.xlu0.b32.cont [12/16] 0.0, 128
    %434 = vxpose.xlu0.b32.cont [13/16] 0.0, 128
    %435 = vxpose.xlu0.b32.cont [14/16] 0.0, 128
    %436 = vxpose.xlu0.b32.cont [15/16] 0.0, 128
    %437 = vxpose.xlu0.b32.end [16/16] 0.0, 128
    %v438 = vpop.trf.xlu0
    %v439 = vpop.trf.xlu0
    %v440 = vpop.trf.xlu0
    %v441 = vpop.trf.xlu0
    %v442 = vpop.trf.xlu0
    %v443 = vpop.trf.xlu0
    %v444 = vpop.trf.xlu0
    %v445 = vpop.trf.xlu0
    %v446 = vpop.trf.xlu0
    %v447 = vpop.trf.xlu0
    %v448 = vpop.trf.xlu0
    %v449 = vpop.trf.xlu0
    %v450 = vpop.trf.xlu0
    %v451 = vpop.trf.xlu0
    %v452 = vpop.trf.xlu0
    %v453 = vpop.trf.xlu0
    %454 = vxpose.xlu0.b32.start [1/16] %v319, 128
    %455 = vxpose.xlu0.b32.cont [2/16] 0.0, 128
    %456 = vxpose.xlu0.b32.cont [3/16] 0.0, 128
    %457 = vxpose.xlu0.b32.cont [4/16] 0.0, 128
    %458 = vxpose.xlu0.b32.cont [5/16] 0.0, 128
    %459 = vxpose.xlu0.b32.cont [6/16] 0.0, 128
    %460 = vxpose.xlu0.b32.cont [7/16] 0.0, 128
    %461 = vxpose.xlu0.b32.cont [8/16] 0.0, 128
    %462 = vxpose.xlu0.b32.cont [9/16] 0.0, 128
    %463 = vxpose.xlu0.b32.cont [10/16] 0.0, 128
    %464 = vxpose.xlu0.b32.cont [11/16] 0.0, 128
    %465 = vxpose.xlu0.b32.cont [12/16] 0.0, 128
    %466 = vxpose.xlu0.b32.cont [13/16] 0.0, 128
    %467 = vxpose.xlu0.b32.cont [14/16] 0.0, 128
    %468 = vxpose.xlu0.b32.cont [15/16] 0.0, 128
    %469 = vxpose.xlu0.b32.end [16/16] 0.0, 128
    %v470 = vpop.trf.xlu0
    %v471 = vpop.trf.xlu0
    %v472 = vpop.trf.xlu0
    %v473 = vpop.trf.xlu0
    %v474 = vpop.trf.xlu0
    %v475 = vpop.trf.xlu0
    %v476 = vpop.trf.xlu0
    %v477 = vpop.trf.xlu0
    %v478 = vpop.trf.xlu0
    %v479 = vpop.trf.xlu0
    %v480 = vpop.trf.xlu0
    %v481 = vpop.trf.xlu0
    %v482 = vpop.trf.xlu0
    %v483 = vpop.trf.xlu0
    %v484 = vpop.trf.xlu0
    %v485 = vpop.trf.xlu0
    %486 = vxpose.xlu0.b32.start [1/16] %v321, 128
    %487 = vxpose.xlu0.b32.cont [2/16] 0.0, 128
    %488 = vxpose.xlu0.b32.cont [3/16] 0.0, 128
    %489 = vxpose.xlu0.b32.cont [4/16] 0.0, 128
    %490 = vxpose.xlu0.b32.cont [5/16] 0.0, 128
    %491 = vxpose.xlu0.b32.cont [6/16] 0.0, 128
    %492 = vxpose.xlu0.b32.cont [7/16] 0.0, 128
    %493 = vxpose.xlu0.b32.cont [8/16] 0.0, 128
    %494 = vxpose.xlu0.b32.cont [9/16] 0.0, 128
    %495 = vxpose.xlu0.b32.cont [10/16] 0.0, 128
    %496 = vxpose.xlu0.b32.cont [11/16] 0.0, 128
    %497 = vxpose.xlu0.b32.cont [12/16] 0.0, 128
    %498 = vxpose.xlu0.b32.cont [13/16] 0.0, 128
    %499 = vxpose.xlu0.b32.cont [14/16] 0.0, 128
    %500 = vxpose.xlu0.b32.cont [15/16] 0.0, 128
    %501 = vxpose.xlu0.b32.end [16/16] 0.0, 128
    %v502 = vpop.trf.xlu0
    %v503 = vpop.trf.xlu0
    %v504 = vpop.trf.xlu0
    %v505 = vpop.trf.xlu0
    %v506 = vpop.trf.xlu0
    %v507 = vpop.trf.xlu0
    %v508 = vpop.trf.xlu0
    %v509 = vpop.trf.xlu0
    %v510 = vpop.trf.xlu0
    %v511 = vpop.trf.xlu0
    %v512 = vpop.trf.xlu0
    %v513 = vpop.trf.xlu0
    %v514 = vpop.trf.xlu0
    %v515 = vpop.trf.xlu0
    %v516 = vpop.trf.xlu0
    %v517 = vpop.trf.xlu0
    %518 = vxpose.xlu0.b32.start [1/16] %v323, 128
    %519 = vxpose.xlu0.b32.cont [2/16] 0.0, 128
    %520 = vxpose.xlu0.b32.cont [3/16] 0.0, 128
    %521 = vxpose.xlu0.b32.cont [4/16] 0.0, 128
    %522 = vxpose.xlu0.b32.cont [5/16] 0.0, 128
    %523 = vxpose.xlu0.b32.cont [6/16] 0.0, 128
    %524 = vxpose.xlu0.b32.cont [7/16] 0.0, 128
    %525 = vxpose.xlu0.b32.cont [8/16] 0.0, 128
    %526 = vxpose.xlu0.b32.cont [9/16] 0.0, 128
    %527 = vxpose.xlu0.b32.cont [10/16] 0.0, 128
    %528 = vxpose.xlu0.b32.cont [11/16] 0.0, 128
    %529 = vxpose.xlu0.b32.cont [12/16] 0.0, 128
    %530 = vxpose.xlu0.b32.cont [13/16] 0.0, 128
    %531 = vxpose.xlu0.b32.cont [14/16] 0.0, 128
    %532 = vxpose.xlu0.b32.cont [15/16] 0.0, 128
    %533 = vxpose.xlu0.b32.end [16/16] 0.0, 128
    %v534 = vpop.trf.xlu0
    %v535 = vpop.trf.xlu0
    %v536 = vpop.trf.xlu0
    %v537 = vpop.trf.xlu0
    %v538 = vpop.trf.xlu0
    %v539 = vpop.trf.xlu0
    %v540 = vpop.trf.xlu0
    %v541 = vpop.trf.xlu0
    %v542 = vpop.trf.xlu0
    %v543 = vpop.trf.xlu0
    %v544 = vpop.trf.xlu0
    %v545 = vpop.trf.xlu0
    %v546 = vpop.trf.xlu0
    %v547 = vpop.trf.xlu0
    %v548 = vpop.trf.xlu0
    %v549 = vpop.trf.xlu0
    %550 = vxpose.xlu0.b32.start [1/16] %v325, 128
    %551 = vxpose.xlu0.b32.cont [2/16] 0.0, 128
    %552 = vxpose.xlu0.b32.cont [3/16] 0.0, 128
    %553 = vxpose.xlu0.b32.cont [4/16] 0.0, 128
    %554 = vxpose.xlu0.b32.cont [5/16] 0.0, 128
    %555 = vxpose.xlu0.b32.cont [6/16] 0.0, 128
    %556 = vxpose.xlu0.b32.cont [7/16] 0.0, 128
    %557 = vxpose.xlu0.b32.cont [8/16] 0.0, 128
    %558 = vxpose.xlu0.b32.cont [9/16] 0.0, 128
    %559 = vxpose.xlu0.b32.cont [10/16] 0.0, 128
    %560 = vxpose.xlu0.b32.cont [11/16] 0.0, 128
    %561 = vxpose.xlu0.b32.cont [12/16] 0.0, 128
    %562 = vxpose.xlu0.b32.cont [13/16] 0.0, 128
    %563 = vxpose.xlu0.b32.cont [14/16] 0.0, 128
    %564 = vxpose.xlu0.b32.cont [15/16] 0.0, 128
    %565 = vxpose.xlu0.b32.end [16/16] 0.0, 128
    %v566 = vpop.trf.xlu0
    %v567 = vpop.trf.xlu0
    %v568 = vpop.trf.xlu0
    %v569 = vpop.trf.xlu0
    %v570 = vpop.trf.xlu0
    %v571 = vpop.trf.xlu0
    %v572 = vpop.trf.xlu0
    %v573 = vpop.trf.xlu0
    %v574 = vpop.trf.xlu0
    %v575 = vpop.trf.xlu0
    %v576 = vpop.trf.xlu0
    %v577 = vpop.trf.xlu0
    %v578 = vpop.trf.xlu0
    %v579 = vpop.trf.xlu0
    %v580 = vpop.trf.xlu0
    %v581 = vpop.trf.xlu0
    %582 = vst.msk [vmem:[#allocation6] sm:$0xff] %vm294, %v342
    %583 = vst.msk [vmem:[#allocation6 + $0x20] sm:$0xff] %vm294, %v374
    %584 = vst.msk [vmem:[#allocation6 + $0x40] sm:$0xff] %vm294, %v406
    %585 = vst.msk [vmem:[#allocation6 + $0x60] sm:$0xff] %vm294, %v438
    %586 = vst.msk [vmem:[#allocation6 + $0x80] sm:$0xff] %vm294, %v470
    %587 = vst.msk [vmem:[#allocation6 + $0xa0] sm:$0xff] %vm294, %v502
    %588 = vst.msk [vmem:[#allocation6 + $0xc0] sm:$0xff] %vm294, %v534
    %589 = vst.msk [vmem:[#allocation6 + $0xe0] sm:$0xff] %vm294, %v566
    %s590 = scalar_lea.vmem [#allocation2], 1
    %v591 = vld [vmem:[%s590] ss:$2 sm:$0xff]
    %s592 = scalar_lea.vmem [#allocation2], 17
    %v593 = vld [vmem:[%s592] ss:$2 sm:$0xff]
    %s594 = scalar_lea.vmem [#allocation2], 33
    %v595 = vld [vmem:[%s594] ss:$2 sm:$0xff]
    %s596 = scalar_lea.vmem [#allocation2], 49
    %v597 = vld [vmem:[%s596] ss:$2 sm:$0xff]
    %s598 = scalar_lea.vmem [#allocation2], 65
    %v599 = vld [vmem:[%s598] ss:$2 sm:$0xff]
    %s600 = scalar_lea.vmem [#allocation2], 81
    %v601 = vld [vmem:[%s600] ss:$2 sm:$0xff]
    %s602 = scalar_lea.vmem [#allocation2], 97
    %v603 = vld [vmem:[%s602] ss:$2 sm:$0xff]
    %s604 = scalar_lea.vmem [#allocation2], 113
    %v605 = vld [vmem:[%s604] ss:$2 sm:$0xff]
    %606 = vxpose.xlu0.b32.start [1/16] %v591, 128
    %607 = vxpose.xlu0.b32.cont [2/16] 0.0, 128
    %608 = vxpose.xlu0.b32.cont [3/16] 0.0, 128
    %609 = vxpose.xlu0.b32.cont [4/16] 0.0, 128
    %610 = vxpose.xlu0.b32.cont [5/16] 0.0, 128
    %611 = vxpose.xlu0.b32.cont [6/16] 0.0, 128
    %612 = vxpose.xlu0.b32.cont [7/16] 0.0, 128
    %613 = vxpose.xlu0.b32.cont [8/16] 0.0, 128
    %614 = vxpose.xlu0.b32.cont [9/16] 0.0, 128
    %615 = vxpose.xlu0.b32.cont [10/16] 0.0, 128
    %616 = vxpose.xlu0.b32.cont [11/16] 0.0, 128
    %617 = vxpose.xlu0.b32.cont [12/16] 0.0, 128
    %618 = vxpose.xlu0.b32.cont [13/16] 0.0, 128
    %619 = vxpose.xlu0.b32.cont [14/16] 0.0, 128
    %620 = vxpose.xlu0.b32.cont [15/16] 0.0, 128
    %621 = vxpose.xlu0.b32.end [16/16] 0.0, 128
    %v622 = vpop.trf.xlu0
    %v623 = vpop.trf.xlu0
    %v624 = vpop.trf.xlu0
    %v625 = vpop.trf.xlu0
    %v626 = vpop.trf.xlu0
    %v627 = vpop.trf.xlu0
    %v628 = vpop.trf.xlu0
    %v629 = vpop.trf.xlu0
    %v630 = vpop.trf.xlu0
    %v631 = vpop.trf.xlu0
    %v632 = vpop.trf.xlu0
    %v633 = vpop.trf.xlu0
    %v634 = vpop.trf.xlu0
    %v635 = vpop.trf.xlu0
    %v636 = vpop.trf.xlu0
    %v637 = vpop.trf.xlu0
    %638 = vxpose.xlu0.b32.start [1/16] %v593, 128
    %639 = vxpose.xlu0.b32.cont [2/16] 0.0, 128
    %640 = vxpose.xlu0.b32.cont [3/16] 0.0, 128
    %641 = vxpose.xlu0.b32.cont [4/16] 0.0, 128
    %642 = vxpose.xlu0.b32.cont [5/16] 0.0, 128
    %643 = vxpose.xlu0.b32.cont [6/16] 0.0, 128
    %644 = vxpose.xlu0.b32.cont [7/16] 0.0, 128
    %645 = vxpose.xlu0.b32.cont [8/16] 0.0, 128
    %646 = vxpose.xlu0.b32.cont [9/16] 0.0, 128
    %647 = vxpose.xlu0.b32.cont [10/16] 0.0, 128
    %648 = vxpose.xlu0.b32.cont [11/16] 0.0, 128
    %649 = vxpose.xlu0.b32.cont [12/16] 0.0, 128
    %650 = vxpose.xlu0.b32.cont [13/16] 0.0, 128
    %651 = vxpose.xlu0.b32.cont [14/16] 0.0, 128
    %652 = vxpose.xlu0.b32.cont [15/16] 0.0, 128
    %653 = vxpose.xlu0.b32.end [16/16] 0.0, 128
    %v654 = vpop.trf.xlu0
    %v655 = vpop.trf.xlu0
    %v656 = vpop.trf.xlu0
    %v657 = vpop.trf.xlu0
    %v658 = vpop.trf.xlu0
    %v659 = vpop.trf.xlu0
    %v660 = vpop.trf.xlu0
    %v661 = vpop.trf.xlu0
    %v662 = vpop.trf.xlu0
    %v663 = vpop.trf.xlu0
    %v664 = vpop.trf.xlu0
    %v665 = vpop.trf.xlu0
    %v666 = vpop.trf.xlu0
    %v667 = vpop.trf.xlu0
    %v668 = vpop.trf.xlu0
    %v669 = vpop.trf.xlu0
    %670 = vxpose.xlu0.b32.start [1/16] %v595, 128
    %671 = vxpose.xlu0.b32.cont [2/16] 0.0, 128
    %672 = vxpose.xlu0.b32.cont [3/16] 0.0, 128
    %673 = vxpose.xlu0.b32.cont [4/16] 0.0, 128
    %674 = vxpose.xlu0.b32.cont [5/16] 0.0, 128
    %675 = vxpose.xlu0.b32.cont [6/16] 0.0, 128
    %676 = vxpose.xlu0.b32.cont [7/16] 0.0, 128
    %677 = vxpose.xlu0.b32.cont [8/16] 0.0, 128
    %678 = vxpose.xlu0.b32.cont [9/16] 0.0, 128
    %679 = vxpose.xlu0.b32.cont [10/16] 0.0, 128
    %680 = vxpose.xlu0.b32.cont [11/16] 0.0, 128
    %681 = vxpose.xlu0.b32.cont [12/16] 0.0, 128
    %682 = vxpose.xlu0.b32.cont [13/16] 0.0, 128
    %683 = vxpose.xlu0.b32.cont [14/16] 0.0, 128
    %684 = vxpose.xlu0.b32.cont [15/16] 0.0, 128
    %685 = vxpose.xlu0.b32.end [16/16] 0.0, 128
    %v686 = vpop.trf.xlu0
    %v687 = vpop.trf.xlu0
    %v688 = vpop.trf.xlu0
    %v689 = vpop.trf.xlu0
    %v690 = vpop.trf.xlu0
    %v691 = vpop.trf.xlu0
    %v692 = vpop.trf.xlu0
    %v693 = vpop.trf.xlu0
    %v694 = vpop.trf.xlu0
    %v695 = vpop.trf.xlu0
    %v696 = vpop.trf.xlu0
    %v697 = vpop.trf.xlu0
    %v698 = vpop.trf.xlu0
    %v699 = vpop.trf.xlu0
    %v700 = vpop.trf.xlu0
    %v701 = vpop.trf.xlu0
    %702 = vxpose.xlu0.b32.start [1/16] %v597, 128
    %703 = vxpose.xlu0.b32.cont [2/16] 0.0, 128
    %704 = vxpose.xlu0.b32.cont [3/16] 0.0, 128
    %705 = vxpose.xlu0.b32.cont [4/16] 0.0, 128
    %706 = vxpose.xlu0.b32.cont [5/16] 0.0, 128
    %707 = vxpose.xlu0.b32.cont [6/16] 0.0, 128
    %708 = vxpose.xlu0.b32.cont [7/16] 0.0, 128
    %709 = vxpose.xlu0.b32.cont [8/16] 0.0, 128
    %710 = vxpose.xlu0.b32.cont [9/16] 0.0, 128
    %711 = vxpose.xlu0.b32.cont [10/16] 0.0, 128
    %712 = vxpose.xlu0.b32.cont [11/16] 0.0, 128
    %713 = vxpose.xlu0.b32.cont [12/16] 0.0, 128
    %714 = vxpose.xlu0.b32.cont [13/16] 0.0, 128
    %715 = vxpose.xlu0.b32.cont [14/16] 0.0, 128
    %716 = vxpose.xlu0.b32.cont [15/16] 0.0, 128
    %717 = vxpose.xlu0.b32.end [16/16] 0.0, 128
    %v718 = vpop.trf.xlu0
    %v719 = vpop.trf.xlu0
    %v720 = vpop.trf.xlu0
    %v721 = vpop.trf.xlu0
    %v722 = vpop.trf.xlu0
    %v723 = vpop.trf.xlu0
    %v724 = vpop.trf.xlu0
    %v725 = vpop.trf.xlu0
    %v726 = vpop.trf.xlu0
    %v727 = vpop.trf.xlu0
    %v728 = vpop.trf.xlu0
    %v729 = vpop.trf.xlu0
    %v730 = vpop.trf.xlu0
    %v731 = vpop.trf.xlu0
    %v732 = vpop.trf.xlu0
    %v733 = vpop.trf.xlu0
    %734 = vxpose.xlu0.b32.start [1/16] %v599, 128
    %735 = vxpose.xlu0.b32.cont [2/16] 0.0, 128
    %736 = vxpose.xlu0.b32.cont [3/16] 0.0, 128
    %737 = vxpose.xlu0.b32.cont [4/16] 0.0, 128
    %738 = vxpose.xlu0.b32.cont [5/16] 0.0, 128
    %739 = vxpose.xlu0.b32.cont [6/16] 0.0, 128
    %740 = vxpose.xlu0.b32.cont [7/16] 0.0, 128
    %741 = vxpose.xlu0.b32.cont [8/16] 0.0, 128
    %742 = vxpose.xlu0.b32.cont [9/16] 0.0, 128
    %743 = vxpose.xlu0.b32.cont [10/16] 0.0, 128
    %744 = vxpose.xlu0.b32.cont [11/16] 0.0, 128
    %745 = vxpose.xlu0.b32.cont [12/16] 0.0, 128
    %746 = vxpose.xlu0.b32.cont [13/16] 0.0, 128
    %747 = vxpose.xlu0.b32.cont [14/16] 0.0, 128
    %748 = vxpose.xlu0.b32.cont [15/16] 0.0, 128
    %749 = vxpose.xlu0.b32.end [16/16] 0.0, 128
    %v750 = vpop.trf.xlu0
    %v751 = vpop.trf.xlu0
    %v752 = vpop.trf.xlu0
    %v753 = vpop.trf.xlu0
    %v754 = vpop.trf.xlu0
    %v755 = vpop.trf.xlu0
    %v756 = vpop.trf.xlu0
    %v757 = vpop.trf.xlu0
    %v758 = vpop.trf.xlu0
    %v759 = vpop.trf.xlu0
    %v760 = vpop.trf.xlu0
    %v761 = vpop.trf.xlu0
    %v762 = vpop.trf.xlu0
    %v763 = vpop.trf.xlu0
    %v764 = vpop.trf.xlu0
    %v765 = vpop.trf.xlu0
    %766 = vxpose.xlu0.b32.start [1/16] %v601, 128
    %767 = vxpose.xlu0.b32.cont [2/16] 0.0, 128
    %768 = vxpose.xlu0.b32.cont [3/16] 0.0, 128
    %769 = vxpose.xlu0.b32.cont [4/16] 0.0, 128
    %770 = vxpose.xlu0.b32.cont [5/16] 0.0, 128
    %771 = vxpose.xlu0.b32.cont [6/16] 0.0, 128
    %772 = vxpose.xlu0.b32.cont [7/16] 0.0, 128
    %773 = vxpose.xlu0.b32.cont [8/16] 0.0, 128
    %774 = vxpose.xlu0.b32.cont [9/16] 0.0, 128
    %775 = vxpose.xlu0.b32.cont [10/16] 0.0, 128
    %776 = vxpose.xlu0.b32.cont [11/16] 0.0, 128
    %777 = vxpose.xlu0.b32.cont [12/16] 0.0, 128
    %778 = vxpose.xlu0.b32.cont [13/16] 0.0, 128
    %779 = vxpose.xlu0.b32.cont [14/16] 0.0, 128
    %780 = vxpose.xlu0.b32.cont [15/16] 0.0, 128
    %781 = vxpose.xlu0.b32.end [16/16] 0.0, 128
    %v782 = vpop.trf.xlu0
    %v783 = vpop.trf.xlu0
    %v784 = vpop.trf.xlu0
    %v785 = vpop.trf.xlu0
    %v786 = vpop.trf.xlu0
    %v787 = vpop.trf.xlu0
    %v788 = vpop.trf.xlu0
    %v789 = vpop.trf.xlu0
    %v790 = vpop.trf.xlu0
    %v791 = vpop.trf.xlu0
    %v792 = vpop.trf.xlu0
    %v793 = vpop.trf.xlu0
    %v794 = vpop.trf.xlu0
    %v795 = vpop.trf.xlu0
    %v796 = vpop.trf.xlu0
    %v797 = vpop.trf.xlu0
    %798 = vxpose.xlu0.b32.start [1/16] %v603, 128
    %799 = vxpose.xlu0.b32.cont [2/16] 0.0, 128
    %800 = vxpose.xlu0.b32.cont [3/16] 0.0, 128
    %801 = vxpose.xlu0.b32.cont [4/16] 0.0, 128
    %802 = vxpose.xlu0.b32.cont [5/16] 0.0, 128
    %803 = vxpose.xlu0.b32.cont [6/16] 0.0, 128
    %804 = vxpose.xlu0.b32.cont [7/16] 0.0, 128
    %805 = vxpose.xlu0.b32.cont [8/16] 0.0, 128
    %806 = vxpose.xlu0.b32.cont [9/16] 0.0, 128
    %807 = vxpose.xlu0.b32.cont [10/16] 0.0, 128
    %808 = vxpose.xlu0.b32.cont [11/16] 0.0, 128
    %809 = vxpose.xlu0.b32.cont [12/16] 0.0, 128
    %810 = vxpose.xlu0.b32.cont [13/16] 0.0, 128
    %811 = vxpose.xlu0.b32.cont [14/16] 0.0, 128
    %812 = vxpose.xlu0.b32.cont [15/16] 0.0, 128
    %813 = vxpose.xlu0.b32.end [16/16] 0.0, 128
    %v814 = vpop.trf.xlu0
    %v815 = vpop.trf.xlu0
    %v816 = vpop.trf.xlu0
    %v817 = vpop.trf.xlu0
    %v818 = vpop.trf.xlu0
    %v819 = vpop.trf.xlu0
    %v820 = vpop.trf.xlu0
    %v821 = vpop.trf.xlu0
    %v822 = vpop.trf.xlu0
    %v823 = vpop.trf.xlu0
    %v824 = vpop.trf.xlu0
    %v825 = vpop.trf.xlu0
    %v826 = vpop.trf.xlu0
    %v827 = vpop.trf.xlu0
    %v828 = vpop.trf.xlu0
    %v829 = vpop.trf.xlu0
    %830 = vxpose.xlu0.b32.start [1/16] %v605, 128
    %831 = vxpose.xlu0.b32.cont [2/16] 0.0, 128
    %832 = vxpose.xlu0.b32.cont [3/16] 0.0, 128
    %833 = vxpose.xlu0.b32.cont [4/16] 0.0, 128
    %834 = vxpose.xlu0.b32.cont [5/16] 0.0, 128
    %835 = vxpose.xlu0.b32.cont [6/16] 0.0, 128
    %836 = vxpose.xlu0.b32.cont [7/16] 0.0, 128
    %837 = vxpose.xlu0.b32.cont [8/16] 0.0, 128
    %838 = vxpose.xlu0.b32.cont [9/16] 0.0, 128
    %839 = vxpose.xlu0.b32.cont [10/16] 0.0, 128
    %840 = vxpose.xlu0.b32.cont [11/16] 0.0, 128
    %841 = vxpose.xlu0.b32.cont [12/16] 0.0, 128
    %842 = vxpose.xlu0.b32.cont [13/16] 0.0, 128
    %843 = vxpose.xlu0.b32.cont [14/16] 0.0, 128
    %844 = vxpose.xlu0.b32.cont [15/16] 0.0, 128
    %845 = vxpose.xlu0.b32.end [16/16] 0.0, 128
    %v846 = vpop.trf.xlu0
    %v847 = vpop.trf.xlu0
    %v848 = vpop.trf.xlu0
    %v849 = vpop.trf.xlu0
    %v850 = vpop.trf.xlu0
    %v851 = vpop.trf.xlu0
    %v852 = vpop.trf.xlu0
    %v853 = vpop.trf.xlu0
    %v854 = vpop.trf.xlu0
    %v855 = vpop.trf.xlu0
    %v856 = vpop.trf.xlu0
    %v857 = vpop.trf.xlu0
    %v858 = vpop.trf.xlu0
    %v859 = vpop.trf.xlu0
    %v860 = vpop.trf.xlu0
    %v861 = vpop.trf.xlu0
    %s862 = scalar_lea.vmem [#allocation6], 8
    %863 = vst.msk [vmem:[%s862] sm:$0xff] %vm294, %v622
    %864 = vst.msk [vmem:[%s862 + $0x20] sm:$0xff] %vm294, %v654
    %865 = vst.msk [vmem:[%s862 + $0x40] sm:$0xff] %vm294, %v686
    %866 = vst.msk [vmem:[%s862 + $0x60] sm:$0xff] %vm294, %v718
    %867 = vst.msk [vmem:[%s862 + $0x80] sm:$0xff] %vm294, %v750
    %868 = vst.msk [vmem:[%s862 + $0xa0] sm:$0xff] %vm294, %v782
    %869 = vst.msk [vmem:[%s862 + $0xc0] sm:$0xff] %vm294, %v814
    %870 = vst.msk [vmem:[%s862 + $0xe0] sm:$0xff] %vm294, %v846
    %s871 = scalar_lea.vmem [#allocation3], 1
    %v872 = vld [vmem:[%s871] ss:$2 sm:$0xff]
    %s873 = scalar_lea.vmem [#allocation3], 17
    %v874 = vld [vmem:[%s873] ss:$2 sm:$0xff]
    %s875 = scalar_lea.vmem [#allocation3], 33
    %v876 = vld [vmem:[%s875] ss:$2 sm:$0xff]
    %s877 = scalar_lea.vmem [#allocation3], 49
    %v878 = vld [vmem:[%s877] ss:$2 sm:$0xff]
    %s879 = scalar_lea.vmem [#allocation3], 65
    %v880 = vld [vmem:[%s879] ss:$2 sm:$0xff]
    %s881 = scalar_lea.vmem [#allocation3], 81
    %v882 = vld [vmem:[%s881] ss:$2 sm:$0xff]
    %s883 = scalar_lea.vmem [#allocation3], 97
    %v884 = vld [vmem:[%s883] ss:$2 sm:$0xff]
    %s885 = scalar_lea.vmem [#allocation3], 113
    %v886 = vld [vmem:[%s885] ss:$2 sm:$0xff]
    %887 = vxpose.xlu0.b32.start [1/16] %v872, 128
    %888 = vxpose.xlu0.b32.cont [2/16] 0.0, 128
    %889 = vxpose.xlu0.b32.cont [3/16] 0.0, 128
    %890 = vxpose.xlu0.b32.cont [4/16] 0.0, 128
    %891 = vxpose.xlu0.b32.cont [5/16] 0.0, 128
    %892 = vxpose.xlu0.b32.cont [6/16] 0.0, 128
    %893 = vxpose.xlu0.b32.cont [7/16] 0.0, 128
    %894 = vxpose.xlu0.b32.cont [8/16] 0.0, 128
    %895 = vxpose.xlu0.b32.cont [9/16] 0.0, 128
    %896 = vxpose.xlu0.b32.cont [10/16] 0.0, 128
    %897 = vxpose.xlu0.b32.cont [11/16] 0.0, 128
    %898 = vxpose.xlu0.b32.cont [12/16] 0.0, 128
    %899 = vxpose.xlu0.b32.cont [13/16] 0.0, 128
    %900 = vxpose.xlu0.b32.cont [14/16] 0.0, 128
    %901 = vxpose.xlu0.b32.cont [15/16] 0.0, 128
    %902 = vxpose.xlu0.b32.end [16/16] 0.0, 128
    %v903 = vpop.trf.xlu0
    %v904 = vpop.trf.xlu0
    %v905 = vpop.trf.xlu0
    %v906 = vpop.trf.xlu0
    %v907 = vpop.trf.xlu0
    %v908 = vpop.trf.xlu0
    %v909 = vpop.trf.xlu0
    %v910 = vpop.trf.xlu0
    %v911 = vpop.trf.xlu0
    %v912 = vpop.trf.xlu0
    %v913 = vpop.trf.xlu0
    %v914 = vpop.trf.xlu0
    %v915 = vpop.trf.xlu0
    %v916 = vpop.trf.xlu0
    %v917 = vpop.trf.xlu0
    %v918 = vpop.trf.xlu0
    %919 = vxpose.xlu0.b32.start [1/16] %v874, 128
    %920 = vxpose.xlu0.b32.cont [2/16] 0.0, 128
    %921 = vxpose.xlu0.b32.cont [3/16] 0.0, 128
    %922 = vxpose.xlu0.b32.cont [4/16] 0.0, 128
    %923 = vxpose.xlu0.b32.cont [5/16] 0.0, 128
    %924 = vxpose.xlu0.b32.cont [6/16] 0.0, 128
    %925 = vxpose.xlu0.b32.cont [7/16] 0.0, 128
    %926 = vxpose.xlu0.b32.cont [8/16] 0.0, 128
    %927 = vxpose.xlu0.b32.cont [9/16] 0.0, 128
    %928 = vxpose.xlu0.b32.cont [10/16] 0.0, 128
    %929 = vxpose.xlu0.b32.cont [11/16] 0.0, 128
    %930 = vxpose.xlu0.b32.cont [12/16] 0.0, 128
    %931 = vxpose.xlu0.b32.cont [13/16] 0.0, 128
    %932 = vxpose.xlu0.b32.cont [14/16] 0.0, 128
    %933 = vxpose.xlu0.b32.cont [15/16] 0.0, 128
    %934 = vxpose.xlu0.b32.end [16/16] 0.0, 128
    %v935 = vpop.trf.xlu0
    %v936 = vpop.trf.xlu0
    %v937 = vpop.trf.xlu0
    %v938 = vpop.trf.xlu0
    %v939 = vpop.trf.xlu0
    %v940 = vpop.trf.xlu0
    %v941 = vpop.trf.xlu0
    %v942 = vpop.trf.xlu0
    %v943 = vpop.trf.xlu0
    %v944 = vpop.trf.xlu0
    %v945 = vpop.trf.xlu0
    %v946 = vpop.trf.xlu0
    %v947 = vpop.trf.xlu0
    %v948 = vpop.trf.xlu0
    %v949 = vpop.trf.xlu0
    %v950 = vpop.trf.xlu0
    %951 = vxpose.xlu0.b32.start [1/16] %v876, 128
    %952 = vxpose.xlu0.b32.cont [2/16] 0.0, 128
    %953 = vxpose.xlu0.b32.cont [3/16] 0.0, 128
    %954 = vxpose.xlu0.b32.cont [4/16] 0.0, 128
    %955 = vxpose.xlu0.b32.cont [5/16] 0.0, 128
    %956 = vxpose.xlu0.b32.cont [6/16] 0.0, 128
    %957 = vxpose.xlu0.b32.cont [7/16] 0.0, 128
    %958 = vxpose.xlu0.b32.cont [8/16] 0.0, 128
    %959 = vxpose.xlu0.b32.cont [9/16] 0.0, 128
    %960 = vxpose.xlu0.b32.cont [10/16] 0.0, 128
    %961 = vxpose.xlu0.b32.cont [11/16] 0.0, 128
    %962 = vxpose.xlu0.b32.cont [12/16] 0.0, 128
    %963 = vxpose.xlu0.b32.cont [13/16] 0.0, 128
    %964 = vxpose.xlu0.b32.cont [14/16] 0.0, 128
    %965 = vxpose.xlu0.b32.cont [15/16] 0.0, 128
    %966 = vxpose.xlu0.b32.end [16/16] 0.0, 128
    %v967 = vpop.trf.xlu0
    %v968 = vpop.trf.xlu0
    %v969 = vpop.trf.xlu0
    %v970 = vpop.trf.xlu0
    %v971 = vpop.trf.xlu0
    %v972 = vpop.trf.xlu0
    %v973 = vpop.trf.xlu0
    %v974 = vpop.trf.xlu0
    %v975 = vpop.trf.xlu0
    %v976 = vpop.trf.xlu0
    %v977 = vpop.trf.xlu0
    %v978 = vpop.trf.xlu0
    %v979 = vpop.trf.xlu0
    %v980 = vpop.trf.xlu0
    %v981 = vpop.trf.xlu0
    %v982 = vpop.trf.xlu0
    %983 = vxpose.xlu0.b32.start [1/16] %v878, 128
    %984 = vxpose.xlu0.b32.cont [2/16] 0.0, 128
    %985 = vxpose.xlu0.b32.cont [3/16] 0.0, 128
    %986 = vxpose.xlu0.b32.cont [4/16] 0.0, 128
    %987 = vxpose.xlu0.b32.cont [5/16] 0.0, 128
    %988 = vxpose.xlu0.b32.cont [6/16] 0.0, 128
    %989 = vxpose.xlu0.b32.cont [7/16] 0.0, 128
    %990 = vxpose.xlu0.b32.cont [8/16] 0.0, 128
    %991 = vxpose.xlu0.b32.cont [9/16] 0.0, 128
    %992 = vxpose.xlu0.b32.cont [10/16] 0.0, 128
    %993 = vxpose.xlu0.b32.cont [11/16] 0.0, 128
    %994 = vxpose.xlu0.b32.cont [12/16] 0.0, 128
    %995 = vxpose.xlu0.b32.cont [13/16] 0.0, 128
    %996 = vxpose.xlu0.b32.cont [14/16] 0.0, 128
    %997 = vxpose.xlu0.b32.cont [15/16] 0.0, 128
    %998 = vxpose.xlu0.b32.end [16/16] 0.0, 128
    %v999 = vpop.trf.xlu0
    %v1000 = vpop.trf.xlu0
    %v1001 = vpop.trf.xlu0
    %v1002 = vpop.trf.xlu0
    %v1003 = vpop.trf.xlu0
    %v1004 = vpop.trf.xlu0
    %v1005 = vpop.trf.xlu0
    %v1006 = vpop.trf.xlu0
    %v1007 = vpop.trf.xlu0
    %v1008 = vpop.trf.xlu0
    %v1009 = vpop.trf.xlu0
    %v1010 = vpop.trf.xlu0
    %v1011 = vpop.trf.xlu0
    %v1012 = vpop.trf.xlu0
    %v1013 = vpop.trf.xlu0
    %v1014 = vpop.trf.xlu0
    %1015 = vxpose.xlu0.b32.start [1/16] %v880, 128
    %1016 = vxpose.xlu0.b32.cont [2/16] 0.0, 128
    %1017 = vxpose.xlu0.b32.cont [3/16] 0.0, 128
    %1018 = vxpose.xlu0.b32.cont [4/16] 0.0, 128
    %1019 = vxpose.xlu0.b32.cont [5/16] 0.0, 128
    %1020 = vxpose.xlu0.b32.cont [6/16] 0.0, 128
    %1021 = vxpose.xlu0.b32.cont [7/16] 0.0, 128
    %1022 = vxpose.xlu0.b32.cont [8/16] 0.0, 128
    %1023 = vxpose.xlu0.b32.cont [9/16] 0.0, 128
    %1024 = vxpose.xlu0.b32.cont [10/16] 0.0, 128
    %1025 = vxpose.xlu0.b32.cont [11/16] 0.0, 128
    %1026 = vxpose.xlu0.b32.cont [12/16] 0.0, 128
    %1027 = vxpose.xlu0.b32.cont [13/16] 0.0, 128
    %1028 = vxpose.xlu0.b32.cont [14/16] 0.0, 128
    %1029 = vxpose.xlu0.b32.cont [15/16] 0.0, 128
    %1030 = vxpose.xlu0.b32.end [16/16] 0.0, 128
    %v1031 = vpop.trf.xlu0
    %v1032 = vpop.trf.xlu0
    %v1033 = vpop.trf.xlu0
    %v1034 = vpop.trf.xlu0
    %v1035 = vpop.trf.xlu0
    %v1036 = vpop.trf.xlu0
    %v1037 = vpop.trf.xlu0
    %v1038 = vpop.trf.xlu0
    %v1039 = vpop.trf.xlu0
    %v1040 = vpop.trf.xlu0
    %v1041 = vpop.trf.xlu0
    %v1042 = vpop.trf.xlu0
    %v1043 = vpop.trf.xlu0
    %v1044 = vpop.trf.xlu0
    %v1045 = vpop.trf.xlu0
    %v1046 = vpop.trf.xlu0
    %1047 = vxpose.xlu0.b32.start [1/16] %v882, 128
    %1048 = vxpose.xlu0.b32.cont [2/16] 0.0, 128
    %1049 = vxpose.xlu0.b32.cont [3/16] 0.0, 128
    %1050 = vxpose.xlu0.b32.cont [4/16] 0.0, 128
    %1051 = vxpose.xlu0.b32.cont [5/16] 0.0, 128
    %1052 = vxpose.xlu0.b32.cont [6/16] 0.0, 128
    %1053 = vxpose.xlu0.b32.cont [7/16] 0.0, 128
    %1054 = vxpose.xlu0.b32.cont [8/16] 0.0, 128
    %1055 = vxpose.xlu0.b32.cont [9/16] 0.0, 128
    %1056 = vxpose.xlu0.b32.cont [10/16] 0.0, 128
    %1057 = vxpose.xlu0.b32.cont [11/16] 0.0, 128
    %1058 = vxpose.xlu0.b32.cont [12/16] 0.0, 128
    %1059 = vxpose.xlu0.b32.cont [13/16] 0.0, 128
    %1060 = vxpose.xlu0.b32.cont [14/16] 0.0, 128
    %1061 = vxpose.xlu0.b32.cont [15/16] 0.0, 128
    %1062 = vxpose.xlu0.b32.end [16/16] 0.0, 128
    %v1063 = vpop.trf.xlu0
    %v1064 = vpop.trf.xlu0
    %v1065 = vpop.trf.xlu0
    %v1066 = vpop.trf.xlu0
    %v1067 = vpop.trf.xlu0
    %v1068 = vpop.trf.xlu0
    %v1069 = vpop.trf.xlu0
    %v1070 = vpop.trf.xlu0
    %v1071 = vpop.trf.xlu0
    %v1072 = vpop.trf.xlu0
    %v1073 = vpop.trf.xlu0
    %v1074 = vpop.trf.xlu0
    %v1075 = vpop.trf.xlu0
    %v1076 = vpop.trf.xlu0
    %v1077 = vpop.trf.xlu0
    %v1078 = vpop.trf.xlu0
    %1079 = vxpose.xlu0.b32.start [1/16] %v884, 128
    %1080 = vxpose.xlu0.b32.cont [2/16] 0.0, 128
    %1081 = vxpose.xlu0.b32.cont [3/16] 0.0, 128
    %1082 = vxpose.xlu0.b32.cont [4/16] 0.0, 128
    %1083 = vxpose.xlu0.b32.cont [5/16] 0.0, 128
    %1084 = vxpose.xlu0.b32.cont [6/16] 0.0, 128
    %1085 = vxpose.xlu0.b32.cont [7/16] 0.0, 128
    %1086 = vxpose.xlu0.b32.cont [8/16] 0.0, 128
    %1087 = vxpose.xlu0.b32.cont [9/16] 0.0, 128
    %1088 = vxpose.xlu0.b32.cont [10/16] 0.0, 128
    %1089 = vxpose.xlu0.b32.cont [11/16] 0.0, 128
    %1090 = vxpose.xlu0.b32.cont [12/16] 0.0, 128
    %1091 = vxpose.xlu0.b32.cont [13/16] 0.0, 128
    %1092 = vxpose.xlu0.b32.cont [14/16] 0.0, 128
    %1093 = vxpose.xlu0.b32.cont [15/16] 0.0, 128
    %1094 = vxpose.xlu0.b32.end [16/16] 0.0, 128
    %v1095 = vpop.trf.xlu0
    %v1096 = vpop.trf.xlu0
    %v1097 = vpop.trf.xlu0
    %v1098 = vpop.trf.xlu0
    %v1099 = vpop.trf.xlu0
    %v1100 = vpop.trf.xlu0
    %v1101 = vpop.trf.xlu0
    %v1102 = vpop.trf.xlu0
    %v1103 = vpop.trf.xlu0
    %v1104 = vpop.trf.xlu0
    %v1105 = vpop.trf.xlu0
    %v1106 = vpop.trf.xlu0
    %v1107 = vpop.trf.xlu0
    %v1108 = vpop.trf.xlu0
    %v1109 = vpop.trf.xlu0
    %v1110 = vpop.trf.xlu0
    %1111 = vxpose.xlu0.b32.start [1/16] %v886, 128
    %1112 = vxpose.xlu0.b32.cont [2/16] 0.0, 128
    %1113 = vxpose.xlu0.b32.cont [3/16] 0.0, 128
    %1114 = vxpose.xlu0.b32.cont [4/16] 0.0, 128
    %1115 = vxpose.xlu0.b32.cont [5/16] 0.0, 128
    %1116 = vxpose.xlu0.b32.cont [6/16] 0.0, 128
    %1117 = vxpose.xlu0.b32.cont [7/16] 0.0, 128
    %1118 = vxpose.xlu0.b32.cont [8/16] 0.0, 128
    %1119 = vxpose.xlu0.b32.cont [9/16] 0.0, 128
    %1120 = vxpose.xlu0.b32.cont [10/16] 0.0, 128
    %1121 = vxpose.xlu0.b32.cont [11/16] 0.0, 128
    %1122 = vxpose.xlu0.b32.cont [12/16] 0.0, 128
    %1123 = vxpose.xlu0.b32.cont [13/16] 0.0, 128
    %1124 = vxpose.xlu0.b32.cont [14/16] 0.0, 128
    %1125 = vxpose.xlu0.b32.cont [15/16] 0.0, 128
    %1126 = vxpose.xlu0.b32.end [16/16] 0.0, 128
    %v1127 = vpop.trf.xlu0
    %v1128 = vpop.trf.xlu0
    %v1129 = vpop.trf.xlu0
    %v1130 = vpop.trf.xlu0
    %v1131 = vpop.trf.xlu0
    %v1132 = vpop.trf.xlu0
    %v1133 = vpop.trf.xlu0
    %v1134 = vpop.trf.xlu0
    %v1135 = vpop.trf.xlu0
    %v1136 = vpop.trf.xlu0
    %v1137 = vpop.trf.xlu0
    %v1138 = vpop.trf.xlu0
    %v1139 = vpop.trf.xlu0
    %v1140 = vpop.trf.xlu0
    %v1141 = vpop.trf.xlu0
    %v1142 = vpop.trf.xlu0
    %1143 = vst.msk [vmem:[#allocation2] sm:$0xff] %vm294, %v903
    %1144 = vst.msk [vmem:[#allocation2 + $0x8] sm:$0xff] %vm294, %v904
    %1145 = vst.msk [vmem:[#allocation2 + $0x10] sm:$0xff] %vm294, %v935
    %1146 = vst.msk [vmem:[#allocation2 + $0x18] sm:$0xff] %vm294, %v936
    %1147 = vst.msk [vmem:[#allocation2 + $0x20] sm:$0xff] %vm294, %v967
    %1148 = vst.msk [vmem:[#allocation2 + $0x28] sm:$0xff] %vm294, %v968
    %1149 = vst.msk [vmem:[#allocation2 + $0x30] sm:$0xff] %vm294, %v999
    %1150 = vst.msk [vmem:[#allocation2 + $0x38] sm:$0xff] %vm294, %v1000
    %1151 = vst.msk [vmem:[#allocation2 + $0x40] sm:$0xff] %vm294, %v1031
    %1152 = vst.msk [vmem:[#allocation2 + $0x48] sm:$0xff] %vm294, %v1032
    %1153 = vst.msk [vmem:[#allocation2 + $0x50] sm:$0xff] %vm294, %v1063
    %1154 = vst.msk [vmem:[#allocation2 + $0x58] sm:$0xff] %vm294, %v1064
    %1155 = vst.msk [vmem:[#allocation2 + $0x60] sm:$0xff] %vm294, %v1095
    %1156 = vst.msk [vmem:[#allocation2 + $0x68] sm:$0xff] %vm294, %v1096
    %1157 = vst.msk [vmem:[#allocation2 + $0x70] sm:$0xff] %vm294, %v1127
    %1158 = vst.msk [vmem:[#allocation2 + $0x78] sm:$0xff] %vm294, %v1128
    %v1159 = vld [vmem:[#allocation2] ss:$2 sm:$0xff]
    %v1160 = vld [vmem:[%s312] ss:$2 sm:$0xff]
    %v1161 = vld [vmem:[%s314] ss:$2 sm:$0xff]
    %v1162 = vld [vmem:[%s316] ss:$2 sm:$0xff]
    %v1163 = vld [vmem:[%s318] ss:$2 sm:$0xff]
    %v1164 = vld [vmem:[%s320] ss:$2 sm:$0xff]
    %v1165 = vld [vmem:[%s322] ss:$2 sm:$0xff]
    %v1166 = vld [vmem:[%s324] ss:$2 sm:$0xff]
    %1167 = vxpose.xlu0.b32.start [1/16] %v1159, 128
    %1168 = vxpose.xlu0.b32.cont [2/16] 0.0, 128
    %1169 = vxpose.xlu0.b32.cont [3/16] 0.0, 128
    %1170 = vxpose.xlu0.b32.cont [4/16] 0.0, 128
    %1171 = vxpose.xlu0.b32.cont [5/16] 0.0, 128
    %1172 = vxpose.xlu0.b32.cont [6/16] 0.0, 128
    %1173 = vxpose.xlu0.b32.cont [7/16] 0.0, 128
    %1174 = vxpose.xlu0.b32.cont [8/16] 0.0, 128
    %1175 = vxpose.xlu0.b32.cont [9/16] 0.0, 128
    %1176 = vxpose.xlu0.b32.cont [10/16] 0.0, 128
    %1177 = vxpose.xlu0.b32.cont [11/16] 0.0, 128
    %1178 = vxpose.xlu0.b32.cont [12/16] 0.0, 128
    %1179 = vxpose.xlu0.b32.cont [13/16] 0.0, 128
    %1180 = vxpose.xlu0.b32.cont [14/16] 0.0, 128
    %1181 = vxpose.xlu0.b32.cont [15/16] 0.0, 128
    %1182 = vxpose.xlu0.b32.end [16/16] 0.0, 128
    %v1183 = vpop.trf.xlu0
    %v1184 = vpop.trf.xlu0
    %v1185 = vpop.trf.xlu0
    %v1186 = vpop.trf.xlu0
    %v1187 = vpop.trf.xlu0
    %v1188 = vpop.trf.xlu0
    %v1189 = vpop.trf.xlu0
    %v1190 = vpop.trf.xlu0
    %v1191 = vpop.trf.xlu0
    %v1192 = vpop.trf.xlu0
    %v1193 = vpop.trf.xlu0
    %v1194 = vpop.trf.xlu0
    %v1195 = vpop.trf.xlu0
    %v1196 = vpop.trf.xlu0
    %v1197 = vpop.trf.xlu0
    %v1198 = vpop.trf.xlu0
    %1199 = vxpose.xlu0.b32.start [1/16] %v1160, 128
    %1200 = vxpose.xlu0.b32.cont [2/16] 0.0, 128
    %1201 = vxpose.xlu0.b32.cont [3/16] 0.0, 128
    %1202 = vxpose.xlu0.b32.cont [4/16] 0.0, 128
    %1203 = vxpose.xlu0.b32.cont [5/16] 0.0, 128
    %1204 = vxpose.xlu0.b32.cont [6/16] 0.0, 128
    %1205 = vxpose.xlu0.b32.cont [7/16] 0.0, 128
    %1206 = vxpose.xlu0.b32.cont [8/16] 0.0, 128
    %1207 = vxpose.xlu0.b32.cont [9/16] 0.0, 128
    %1208 = vxpose.xlu0.b32.cont [10/16] 0.0, 128
    %1209 = vxpose.xlu0.b32.cont [11/16] 0.0, 128
    %1210 = vxpose.xlu0.b32.cont [12/16] 0.0, 128
    %1211 = vxpose.xlu0.b32.cont [13/16] 0.0, 128
    %1212 = vxpose.xlu0.b32.cont [14/16] 0.0, 128
    %1213 = vxpose.xlu0.b32.cont [15/16] 0.0, 128
    %1214 = vxpose.xlu0.b32.end [16/16] 0.0, 128
    %v1215 = vpop.trf.xlu0
    %v1216 = vpop.trf.xlu0
    %v1217 = vpop.trf.xlu0
    %v1218 = vpop.trf.xlu0
    %v1219 = vpop.trf.xlu0
    %v1220 = vpop.trf.xlu0
    %v1221 = vpop.trf.xlu0
    %v1222 = vpop.trf.xlu0
    %v1223 = vpop.trf.xlu0
    %v1224 = vpop.trf.xlu0
    %v1225 = vpop.trf.xlu0
    %v1226 = vpop.trf.xlu0
    %v1227 = vpop.trf.xlu0
    %v1228 = vpop.trf.xlu0
    %v1229 = vpop.trf.xlu0
    %v1230 = vpop.trf.xlu0
    %1231 = vxpose.xlu0.b32.start [1/16] %v1161, 128
    %1232 = vxpose.xlu0.b32.cont [2/16] 0.0, 128
    %1233 = vxpose.xlu0.b32.cont [3/16] 0.0, 128
    %1234 = vxpose.xlu0.b32.cont [4/16] 0.0, 128
    %1235 = vxpose.xlu0.b32.cont [5/16] 0.0, 128
    %1236 = vxpose.xlu0.b32.cont [6/16] 0.0, 128
    %1237 = vxpose.xlu0.b32.cont [7/16] 0.0, 128
    %1238 = vxpose.xlu0.b32.cont [8/16] 0.0, 128
    %1239 = vxpose.xlu0.b32.cont [9/16] 0.0, 128
    %1240 = vxpose.xlu0.b32.cont [10/16] 0.0, 128
    %1241 = vxpose.xlu0.b32.cont [11/16] 0.0, 128
    %1242 = vxpose.xlu0.b32.cont [12/16] 0.0, 128
    %1243 = vxpose.xlu0.b32.cont [13/16] 0.0, 128
    %1244 = vxpose.xlu0.b32.cont [14/16] 0.0, 128
    %1245 = vxpose.xlu0.b32.cont [15/16] 0.0, 128
    %1246 = vxpose.xlu0.b32.end [16/16] 0.0, 128
    %v1247 = vpop.trf.xlu0
    %v1248 = vpop.trf.xlu0
    %v1249 = vpop.trf.xlu0
    %v1250 = vpop.trf.xlu0
    %v1251 = vpop.trf.xlu0
    %v1252 = vpop.trf.xlu0
    %v1253 = vpop.trf.xlu0
    %v1254 = vpop.trf.xlu0
    %v1255 = vpop.trf.xlu0
    %v1256 = vpop.trf.xlu0
    %v1257 = vpop.trf.xlu0
    %v1258 = vpop.trf.xlu0
    %v1259 = vpop.trf.xlu0
    %v1260 = vpop.trf.xlu0
    %v1261 = vpop.trf.xlu0
    %v1262 = vpop.trf.xlu0
    %1263 = vxpose.xlu0.b32.start [1/16] %v1162, 128
    %1264 = vxpose.xlu0.b32.cont [2/16] 0.0, 128
    %1265 = vxpose.xlu0.b32.cont [3/16] 0.0, 128
    %1266 = vxpose.xlu0.b32.cont [4/16] 0.0, 128
    %1267 = vxpose.xlu0.b32.cont [5/16] 0.0, 128
    %1268 = vxpose.xlu0.b32.cont [6/16] 0.0, 128
    %1269 = vxpose.xlu0.b32.cont [7/16] 0.0, 128
    %1270 = vxpose.xlu0.b32.cont [8/16] 0.0, 128
    %1271 = vxpose.xlu0.b32.cont [9/16] 0.0, 128
    %1272 = vxpose.xlu0.b32.cont [10/16] 0.0, 128
    %1273 = vxpose.xlu0.b32.cont [11/16] 0.0, 128
    %1274 = vxpose.xlu0.b32.cont [12/16] 0.0, 128
    %1275 = vxpose.xlu0.b32.cont [13/16] 0.0, 128
    %1276 = vxpose.xlu0.b32.cont [14/16] 0.0, 128
    %1277 = vxpose.xlu0.b32.cont [15/16] 0.0, 128
    %1278 = vxpose.xlu0.b32.end [16/16] 0.0, 128
    %v1279 = vpop.trf.xlu0
    %v1280 = vpop.trf.xlu0
    %v1281 = vpop.trf.xlu0
    %v1282 = vpop.trf.xlu0
    %v1283 = vpop.trf.xlu0
    %v1284 = vpop.trf.xlu0
    %v1285 = vpop.trf.xlu0
    %v1286 = vpop.trf.xlu0
    %v1287 = vpop.trf.xlu0
    %v1288 = vpop.trf.xlu0
    %v1289 = vpop.trf.xlu0
    %v1290 = vpop.trf.xlu0
    %v1291 = vpop.trf.xlu0
    %v1292 = vpop.trf.xlu0
    %v1293 = vpop.trf.xlu0
    %v1294 = vpop.trf.xlu0
    %1295 = vxpose.xlu0.b32.start [1/16] %v1163, 128
    %1296 = vxpose.xlu0.b32.cont [2/16] 0.0, 128
    %1297 = vxpose.xlu0.b32.cont [3/16] 0.0, 128
    %1298 = vxpose.xlu0.b32.cont [4/16] 0.0, 128
    %1299 = vxpose.xlu0.b32.cont [5/16] 0.0, 128
    %1300 = vxpose.xlu0.b32.cont [6/16] 0.0, 128
    %1301 = vxpose.xlu0.b32.cont [7/16] 0.0, 128
    %1302 = vxpose.xlu0.b32.cont [8/16] 0.0, 128
    %1303 = vxpose.xlu0.b32.cont [9/16] 0.0, 128
    %1304 = vxpose.xlu0.b32.cont [10/16] 0.0, 128
    %1305 = vxpose.xlu0.b32.cont [11/16] 0.0, 128
    %1306 = vxpose.xlu0.b32.cont [12/16] 0.0, 128
    %1307 = vxpose.xlu0.b32.cont [13/16] 0.0, 128
    %1308 = vxpose.xlu0.b32.cont [14/16] 0.0, 128
    %1309 = vxpose.xlu0.b32.cont [15/16] 0.0, 128
    %1310 = vxpose.xlu0.b32.end [16/16] 0.0, 128
    %v1311 = vpop.trf.xlu0
    %v1312 = vpop.trf.xlu0
    %v1313 = vpop.trf.xlu0
    %v1314 = vpop.trf.xlu0
    %v1315 = vpop.trf.xlu0
    %v1316 = vpop.trf.xlu0
    %v1317 = vpop.trf.xlu0
    %v1318 = vpop.trf.xlu0
    %v1319 = vpop.trf.xlu0
    %v1320 = vpop.trf.xlu0
    %v1321 = vpop.trf.xlu0
    %v1322 = vpop.trf.xlu0
    %v1323 = vpop.trf.xlu0
    %v1324 = vpop.trf.xlu0
    %v1325 = vpop.trf.xlu0
    %v1326 = vpop.trf.xlu0
    %1327 = vxpose.xlu0.b32.start [1/16] %v1164, 128
    %1328 = vxpose.xlu0.b32.cont [2/16] 0.0, 128
    %1329 = vxpose.xlu0.b32.cont [3/16] 0.0, 128
    %1330 = vxpose.xlu0.b32.cont [4/16] 0.0, 128
    %1331 = vxpose.xlu0.b32.cont [5/16] 0.0, 128
    %1332 = vxpose.xlu0.b32.cont [6/16] 0.0, 128
    %1333 = vxpose.xlu0.b32.cont [7/16] 0.0, 128
    %1334 = vxpose.xlu0.b32.cont [8/16] 0.0, 128
    %1335 = vxpose.xlu0.b32.cont [9/16] 0.0, 128
    %1336 = vxpose.xlu0.b32.cont [10/16] 0.0, 128
    %1337 = vxpose.xlu0.b32.cont [11/16] 0.0, 128
    %1338 = vxpose.xlu0.b32.cont [12/16] 0.0, 128
    %1339 = vxpose.xlu0.b32.cont [13/16] 0.0, 128
    %1340 = vxpose.xlu0.b32.cont [14/16] 0.0, 128
    %1341 = vxpose.xlu0.b32.cont [15/16] 0.0, 128
    %1342 = vxpose.xlu0.b32.end [16/16] 0.0, 128
    %v1343 = vpop.trf.xlu0
    %v1344 = vpop.trf.xlu0
    %v1345 = vpop.trf.xlu0
    %v1346 = vpop.trf.xlu0
    %v1347 = vpop.trf.xlu0
    %v1348 = vpop.trf.xlu0
    %v1349 = vpop.trf.xlu0
    %v1350 = vpop.trf.xlu0
    %v1351 = vpop.trf.xlu0
    %v1352 = vpop.trf.xlu0
    %v1353 = vpop.trf.xlu0
    %v1354 = vpop.trf.xlu0
    %v1355 = vpop.trf.xlu0
    %v1356 = vpop.trf.xlu0
    %v1357 = vpop.trf.xlu0
    %v1358 = vpop.trf.xlu0
    %1359 = vxpose.xlu0.b32.start [1/16] %v1165, 128
    %1360 = vxpose.xlu0.b32.cont [2/16] 0.0, 128
    %1361 = vxpose.xlu0.b32.cont [3/16] 0.0, 128
    %1362 = vxpose.xlu0.b32.cont [4/16] 0.0, 128
    %1363 = vxpose.xlu0.b32.cont [5/16] 0.0, 128
    %1364 = vxpose.xlu0.b32.cont [6/16] 0.0, 128
    %1365 = vxpose.xlu0.b32.cont [7/16] 0.0, 128
    %1366 = vxpose.xlu0.b32.cont [8/16] 0.0, 128
    %1367 = vxpose.xlu0.b32.cont [9/16] 0.0, 128
    %1368 = vxpose.xlu0.b32.cont [10/16] 0.0, 128
    %1369 = vxpose.xlu0.b32.cont [11/16] 0.0, 128
    %1370 = vxpose.xlu0.b32.cont [12/16] 0.0, 128
    %1371 = vxpose.xlu0.b32.cont [13/16] 0.0, 128
    %1372 = vxpose.xlu0.b32.cont [14/16] 0.0, 128
    %1373 = vxpose.xlu0.b32.cont [15/16] 0.0, 128
    %1374 = vxpose.xlu0.b32.end [16/16] 0.0, 128
    %v1375 = vpop.trf.xlu0
    %v1376 = vpop.trf.xlu0
    %v1377 = vpop.trf.xlu0
    %v1378 = vpop.trf.xlu0
    %v1379 = vpop.trf.xlu0
    %v1380 = vpop.trf.xlu0
    %v1381 = vpop.trf.xlu0
    %v1382 = vpop.trf.xlu0
    %v1383 = vpop.trf.xlu0
    %v1384 = vpop.trf.xlu0
    %v1385 = vpop.trf.xlu0
    %v1386 = vpop.trf.xlu0
    %v1387 = vpop.trf.xlu0
    %v1388 = vpop.trf.xlu0
    %v1389 = vpop.trf.xlu0
    %v1390 = vpop.trf.xlu0
    %1391 = vxpose.xlu0.b32.start [1/16] %v1166, 128
    %1392 = vxpose.xlu0.b32.cont [2/16] 0.0, 128
    %1393 = vxpose.xlu0.b32.cont [3/16] 0.0, 128
    %1394 = vxpose.xlu0.b32.cont [4/16] 0.0, 128
    %1395 = vxpose.xlu0.b32.cont [5/16] 0.0, 128
    %1396 = vxpose.xlu0.b32.cont [6/16] 0.0, 128
    %1397 = vxpose.xlu0.b32.cont [7/16] 0.0, 128
    %1398 = vxpose.xlu0.b32.cont [8/16] 0.0, 128
    %1399 = vxpose.xlu0.b32.cont [9/16] 0.0, 128
    %1400 = vxpose.xlu0.b32.cont [10/16] 0.0, 128
    %1401 = vxpose.xlu0.b32.cont [11/16] 0.0, 128
    %1402 = vxpose.xlu0.b32.cont [12/16] 0.0, 128
    %1403 = vxpose.xlu0.b32.cont [13/16] 0.0, 128
    %1404 = vxpose.xlu0.b32.cont [14/16] 0.0, 128
    %1405 = vxpose.xlu0.b32.cont [15/16] 0.0, 128
    %1406 = vxpose.xlu0.b32.end [16/16] 0.0, 128
    %v1407 = vpop.trf.xlu0
    %v1408 = vpop.trf.xlu0
    %v1409 = vpop.trf.xlu0
    %v1410 = vpop.trf.xlu0
    %v1411 = vpop.trf.xlu0
    %v1412 = vpop.trf.xlu0
    %v1413 = vpop.trf.xlu0
    %v1414 = vpop.trf.xlu0
    %v1415 = vpop.trf.xlu0
    %v1416 = vpop.trf.xlu0
    %v1417 = vpop.trf.xlu0
    %v1418 = vpop.trf.xlu0
    %v1419 = vpop.trf.xlu0
    %v1420 = vpop.trf.xlu0
    %v1421 = vpop.trf.xlu0
    %v1422 = vpop.trf.xlu0
    %s1423 = scalar_lea.vmem [#allocation6], 16
    %1424 = vst.msk [vmem:[%s1423] sm:$0xff] %vm294, %v1183
    %1425 = vst.msk [vmem:[%s1423 + $0x20] sm:$0xff] %vm294, %v1215
    %1426 = vst.msk [vmem:[%s1423 + $0x40] sm:$0xff] %vm294, %v1247
    %1427 = vst.msk [vmem:[%s1423 + $0x60] sm:$0xff] %vm294, %v1279
    %1428 = vst.msk [vmem:[%s1423 + $0x80] sm:$0xff] %vm294, %v1311
    %1429 = vst.msk [vmem:[%s1423 + $0xa0] sm:$0xff] %vm294, %v1343
    %1430 = vst.msk [vmem:[%s1423 + $0xc0] sm:$0xff] %vm294, %v1375
    %1431 = vst.msk [vmem:[%s1423 + $0xe0] sm:$0xff] %vm294, %v1407
    %v1432 = vld [vmem:[%s590] ss:$2 sm:$0xff]
    %v1433 = vld [vmem:[%s592] ss:$2 sm:$0xff]
    %v1434 = vld [vmem:[%s594] ss:$2 sm:$0xff]
    %v1435 = vld [vmem:[%s596] ss:$2 sm:$0xff]
    %v1436 = vld [vmem:[%s598] ss:$2 sm:$0xff]
    %v1437 = vld [vmem:[%s600] ss:$2 sm:$0xff]
    %v1438 = vld [vmem:[%s602] ss:$2 sm:$0xff]
    %v1439 = vld [vmem:[%s604] ss:$2 sm:$0xff]
    %1440 = vxpose.xlu0.b32.start [1/16] %v1432, 128
    %1441 = vxpose.xlu0.b32.cont [2/16] 0.0, 128
    %1442 = vxpose.xlu0.b32.cont [3/16] 0.0, 128
    %1443 = vxpose.xlu0.b32.cont [4/16] 0.0, 128
    %1444 = vxpose.xlu0.b32.cont [5/16] 0.0, 128
    %1445 = vxpose.xlu0.b32.cont [6/16] 0.0, 128
    %1446 = vxpose.xlu0.b32.cont [7/16] 0.0, 128
    %1447 = vxpose.xlu0.b32.cont [8/16] 0.0, 128
    %1448 = vxpose.xlu0.b32.cont [9/16] 0.0, 128
    %1449 = vxpose.xlu0.b32.cont [10/16] 0.0, 128
    %1450 = vxpose.xlu0.b32.cont [11/16] 0.0, 128
    %1451 = vxpose.xlu0.b32.cont [12/16] 0.0, 128
    %1452 = vxpose.xlu0.b32.cont [13/16] 0.0, 128
    %1453 = vxpose.xlu0.b32.cont [14/16] 0.0, 128
    %1454 = vxpose.xlu0.b32.cont [15/16] 0.0, 128
    %1455 = vxpose.xlu0.b32.end [16/16] 0.0, 128
    %v1456 = vpop.trf.xlu0
    %v1457 = vpop.trf.xlu0
    %v1458 = vpop.trf.xlu0
    %v1459 = vpop.trf.xlu0
    %v1460 = vpop.trf.xlu0
    %v1461 = vpop.trf.xlu0
    %v1462 = vpop.trf.xlu0
    %v1463 = vpop.trf.xlu0
    %v1464 = vpop.trf.xlu0
    %v1465 = vpop.trf.xlu0
    %v1466 = vpop.trf.xlu0
    %v1467 = vpop.trf.xlu0
    %v1468 = vpop.trf.xlu0
    %v1469 = vpop.trf.xlu0
    %v1470 = vpop.trf.xlu0
    %v1471 = vpop.trf.xlu0
    %1472 = vxpose.xlu0.b32.start [1/16] %v1433, 128
    %1473 = vxpose.xlu0.b32.cont [2/16] 0.0, 128
    %1474 = vxpose.xlu0.b32.cont [3/16] 0.0, 128
    %1475 = vxpose.xlu0.b32.cont [4/16] 0.0, 128
    %1476 = vxpose.xlu0.b32.cont [5/16] 0.0, 128
    %1477 = vxpose.xlu0.b32.cont [6/16] 0.0, 128
    %1478 = vxpose.xlu0.b32.cont [7/16] 0.0, 128
    %1479 = vxpose.xlu0.b32.cont [8/16] 0.0, 128
    %1480 = vxpose.xlu0.b32.cont [9/16] 0.0, 128
    %1481 = vxpose.xlu0.b32.cont [10/16] 0.0, 128
    %1482 = vxpose.xlu0.b32.cont [11/16] 0.0, 128
    %1483 = vxpose.xlu0.b32.cont [12/16] 0.0, 128
    %1484 = vxpose.xlu0.b32.cont [13/16] 0.0, 128
    %1485 = vxpose.xlu0.b32.cont [14/16] 0.0, 128
    %1486 = vxpose.xlu0.b32.cont [15/16] 0.0, 128
    %1487 = vxpose.xlu0.b32.end [16/16] 0.0, 128
    %v1488 = vpop.trf.xlu0
    %v1489 = vpop.trf.xlu0
    %v1490 = vpop.trf.xlu0
    %v1491 = vpop.trf.xlu0
    %v1492 = vpop.trf.xlu0
    %v1493 = vpop.trf.xlu0
    %v1494 = vpop.trf.xlu0
    %v1495 = vpop.trf.xlu0
    %v1496 = vpop.trf.xlu0
    %v1497 = vpop.trf.xlu0
    %v1498 = vpop.trf.xlu0
    %v1499 = vpop.trf.xlu0
    %v1500 = vpop.trf.xlu0
    %v1501 = vpop.trf.xlu0
    %v1502 = vpop.trf.xlu0
    %v1503 = vpop.trf.xlu0
    %1504 = vxpose.xlu0.b32.start [1/16] %v1434, 128
    %1505 = vxpose.xlu0.b32.cont [2/16] 0.0, 128
    %1506 = vxpose.xlu0.b32.cont [3/16] 0.0, 128
    %1507 = vxpose.xlu0.b32.cont [4/16] 0.0, 128
    %1508 = vxpose.xlu0.b32.cont [5/16] 0.0, 128
    %1509 = vxpose.xlu0.b32.cont [6/16] 0.0, 128
    %1510 = vxpose.xlu0.b32.cont [7/16] 0.0, 128
    %1511 = vxpose.xlu0.b32.cont [8/16] 0.0, 128
    %1512 = vxpose.xlu0.b32.cont [9/16] 0.0, 128
    %1513 = vxpose.xlu0.b32.cont [10/16] 0.0, 128
    %1514 = vxpose.xlu0.b32.cont [11/16] 0.0, 128
    %1515 = vxpose.xlu0.b32.cont [12/16] 0.0, 128
    %1516 = vxpose.xlu0.b32.cont [13/16] 0.0, 128
    %1517 = vxpose.xlu0.b32.cont [14/16] 0.0, 128
    %1518 = vxpose.xlu0.b32.cont [15/16] 0.0, 128
    %1519 = vxpose.xlu0.b32.end [16/16] 0.0, 128
    %v1520 = vpop.trf.xlu0
    %v1521 = vpop.trf.xlu0
    %v1522 = vpop.trf.xlu0
    %v1523 = vpop.trf.xlu0
    %v1524 = vpop.trf.xlu0
    %v1525 = vpop.trf.xlu0
    %v1526 = vpop.trf.xlu0
    %v1527 = vpop.trf.xlu0
    %v1528 = vpop.trf.xlu0
    %v1529 = vpop.trf.xlu0
    %v1530 = vpop.trf.xlu0
    %v1531 = vpop.trf.xlu0
    %v1532 = vpop.trf.xlu0
    %v1533 = vpop.trf.xlu0
    %v1534 = vpop.trf.xlu0
    %v1535 = vpop.trf.xlu0
    %1536 = vxpose.xlu0.b32.start [1/16] %v1435, 128
    %1537 = vxpose.xlu0.b32.cont [2/16] 0.0, 128
    %1538 = vxpose.xlu0.b32.cont [3/16] 0.0, 128
    %1539 = vxpose.xlu0.b32.cont [4/16] 0.0, 128
    %1540 = vxpose.xlu0.b32.cont [5/16] 0.0, 128
    %1541 = vxpose.xlu0.b32.cont [6/16] 0.0, 128
    %1542 = vxpose.xlu0.b32.cont [7/16] 0.0, 128
    %1543 = vxpose.xlu0.b32.cont [8/16] 0.0, 128
    %1544 = vxpose.xlu0.b32.cont [9/16] 0.0, 128
    %1545 = vxpose.xlu0.b32.cont [10/16] 0.0, 128
    %1546 = vxpose.xlu0.b32.cont [11/16] 0.0, 128
    %1547 = vxpose.xlu0.b32.cont [12/16] 0.0, 128
    %1548 = vxpose.xlu0.b32.cont [13/16] 0.0, 128
    %1549 = vxpose.xlu0.b32.cont [14/16] 0.0, 128
    %1550 = vxpose.xlu0.b32.cont [15/16] 0.0, 128
    %1551 = vxpose.xlu0.b32.end [16/16] 0.0, 128
    %v1552 = vpop.trf.xlu0
    %v1553 = vpop.trf.xlu0
    %v1554 = vpop.trf.xlu0
    %v1555 = vpop.trf.xlu0
    %v1556 = vpop.trf.xlu0
    %v1557 = vpop.trf.xlu0
    %v1558 = vpop.trf.xlu0
    %v1559 = vpop.trf.xlu0
    %v1560 = vpop.trf.xlu0
    %v1561 = vpop.trf.xlu0
    %v1562 = vpop.trf.xlu0
    %v1563 = vpop.trf.xlu0
    %v1564 = vpop.trf.xlu0
    %v1565 = vpop.trf.xlu0
    %v1566 = vpop.trf.xlu0
    %v1567 = vpop.trf.xlu0
    %1568 = vxpose.xlu0.b32.start [1/16] %v1436, 128
    %1569 = vxpose.xlu0.b32.cont [2/16] 0.0, 128
    %1570 = vxpose.xlu0.b32.cont [3/16] 0.0, 128
    %1571 = vxpose.xlu0.b32.cont [4/16] 0.0, 128
    %1572 = vxpose.xlu0.b32.cont [5/16] 0.0, 128
    %1573 = vxpose.xlu0.b32.cont [6/16] 0.0, 128
    %1574 = vxpose.xlu0.b32.cont [7/16] 0.0, 128
    %1575 = vxpose.xlu0.b32.cont [8/16] 0.0, 128
    %1576 = vxpose.xlu0.b32.cont [9/16] 0.0, 128
    %1577 = vxpose.xlu0.b32.cont [10/16] 0.0, 128
    %1578 = vxpose.xlu0.b32.cont [11/16] 0.0, 128
    %1579 = vxpose.xlu0.b32.cont [12/16] 0.0, 128
    %1580 = vxpose.xlu0.b32.cont [13/16] 0.0, 128
    %1581 = vxpose.xlu0.b32.cont [14/16] 0.0, 128
    %1582 = vxpose.xlu0.b32.cont [15/16] 0.0, 128
    %1583 = vxpose.xlu0.b32.end [16/16] 0.0, 128
    %v1584 = vpop.trf.xlu0
    %v1585 = vpop.trf.xlu0
    %v1586 = vpop.trf.xlu0
    %v1587 = vpop.trf.xlu0
    %v1588 = vpop.trf.xlu0
    %v1589 = vpop.trf.xlu0
    %v1590 = vpop.trf.xlu0
    %v1591 = vpop.trf.xlu0
    %v1592 = vpop.trf.xlu0
    %v1593 = vpop.trf.xlu0
    %v1594 = vpop.trf.xlu0
    %v1595 = vpop.trf.xlu0
    %v1596 = vpop.trf.xlu0
    %v1597 = vpop.trf.xlu0
    %v1598 = vpop.trf.xlu0
    %v1599 = vpop.trf.xlu0
    %1600 = vxpose.xlu0.b32.start [1/16] %v1437, 128
    %1601 = vxpose.xlu0.b32.cont [2/16] 0.0, 128
    %1602 = vxpose.xlu0.b32.cont [3/16] 0.0, 128
    %1603 = vxpose.xlu0.b32.cont [4/16] 0.0, 128
    %1604 = vxpose.xlu0.b32.cont [5/16] 0.0, 128
    %1605 = vxpose.xlu0.b32.cont [6/16] 0.0, 128
    %1606 = vxpose.xlu0.b32.cont [7/16] 0.0, 128
    %1607 = vxpose.xlu0.b32.cont [8/16] 0.0, 128
    %1608 = vxpose.xlu0.b32.cont [9/16] 0.0, 128
    %1609 = vxpose.xlu0.b32.cont [10/16] 0.0, 128
    %1610 = vxpose.xlu0.b32.cont [11/16] 0.0, 128
    %1611 = vxpose.xlu0.b32.cont [12/16] 0.0, 128
    %1612 = vxpose.xlu0.b32.cont [13/16] 0.0, 128
    %1613 = vxpose.xlu0.b32.cont [14/16] 0.0, 128
    %1614 = vxpose.xlu0.b32.cont [15/16] 0.0, 128
    %1615 = vxpose.xlu0.b32.end [16/16] 0.0, 128
    %v1616 = vpop.trf.xlu0
    %v1617 = vpop.trf.xlu0
    %v1618 = vpop.trf.xlu0
    %v1619 = vpop.trf.xlu0
    %v1620 = vpop.trf.xlu0
    %v1621 = vpop.trf.xlu0
    %v1622 = vpop.trf.xlu0
    %v1623 = vpop.trf.xlu0
    %v1624 = vpop.trf.xlu0
    %v1625 = vpop.trf.xlu0
    %v1626 = vpop.trf.xlu0
    %v1627 = vpop.trf.xlu0
    %v1628 = vpop.trf.xlu0
    %v1629 = vpop.trf.xlu0
    %v1630 = vpop.trf.xlu0
    %v1631 = vpop.trf.xlu0
    %1632 = vxpose.xlu0.b32.start [1/16] %v1438, 128
    %1633 = vxpose.xlu0.b32.cont [2/16] 0.0, 128
    %1634 = vxpose.xlu0.b32.cont [3/16] 0.0, 128
    %1635 = vxpose.xlu0.b32.cont [4/16] 0.0, 128
    %1636 = vxpose.xlu0.b32.cont [5/16] 0.0, 128
    %1637 = vxpose.xlu0.b32.cont [6/16] 0.0, 128
    %1638 = vxpose.xlu0.b32.cont [7/16] 0.0, 128
    %1639 = vxpose.xlu0.b32.cont [8/16] 0.0, 128
    %1640 = vxpose.xlu0.b32.cont [9/16] 0.0, 128
    %1641 = vxpose.xlu0.b32.cont [10/16] 0.0, 128
    %1642 = vxpose.xlu0.b32.cont [11/16] 0.0, 128
    %1643 = vxpose.xlu0.b32.cont [12/16] 0.0, 128
    %1644 = vxpose.xlu0.b32.cont [13/16] 0.0, 128
    %1645 = vxpose.xlu0.b32.cont [14/16] 0.0, 128
    %1646 = vxpose.xlu0.b32.cont [15/16] 0.0, 128
    %1647 = vxpose.xlu0.b32.end [16/16] 0.0, 128
    %v1648 = vpop.trf.xlu0
    %v1649 = vpop.trf.xlu0
    %v1650 = vpop.trf.xlu0
    %v1651 = vpop.trf.xlu0
    %v1652 = vpop.trf.xlu0
    %v1653 = vpop.trf.xlu0
    %v1654 = vpop.trf.xlu0
    %v1655 = vpop.trf.xlu0
    %v1656 = vpop.trf.xlu0
    %v1657 = vpop.trf.xlu0
    %v1658 = vpop.trf.xlu0
    %v1659 = vpop.trf.xlu0
    %v1660 = vpop.trf.xlu0
    %v1661 = vpop.trf.xlu0
    %v1662 = vpop.trf.xlu0
    %v1663 = vpop.trf.xlu0
    %1664 = vxpose.xlu0.b32.start [1/16] %v1439, 128
    %1665 = vxpose.xlu0.b32.cont [2/16] 0.0, 128
    %1666 = vxpose.xlu0.b32.cont [3/16] 0.0, 128
    %1667 = vxpose.xlu0.b32.cont [4/16] 0.0, 128
    %1668 = vxpose.xlu0.b32.cont [5/16] 0.0, 128
    %1669 = vxpose.xlu0.b32.cont [6/16] 0.0, 128
    %1670 = vxpose.xlu0.b32.cont [7/16] 0.0, 128
    %1671 = vxpose.xlu0.b32.cont [8/16] 0.0, 128
    %1672 = vxpose.xlu0.b32.cont [9/16] 0.0, 128
    %1673 = vxpose.xlu0.b32.cont [10/16] 0.0, 128
    %1674 = vxpose.xlu0.b32.cont [11/16] 0.0, 128
    %1675 = vxpose.xlu0.b32.cont [12/16] 0.0, 128
    %1676 = vxpose.xlu0.b32.cont [13/16] 0.0, 128
    %1677 = vxpose.xlu0.b32.cont [14/16] 0.0, 128
    %1678 = vxpose.xlu0.b32.cont [15/16] 0.0, 128
    %1679 = vxpose.xlu0.b32.end [16/16] 0.0, 128
    %v1680 = vpop.trf.xlu0
    %v1681 = vpop.trf.xlu0
    %v1682 = vpop.trf.xlu0
    %v1683 = vpop.trf.xlu0
    %v1684 = vpop.trf.xlu0
    %v1685 = vpop.trf.xlu0
    %v1686 = vpop.trf.xlu0
    %v1687 = vpop.trf.xlu0
    %v1688 = vpop.trf.xlu0
    %v1689 = vpop.trf.xlu0
    %v1690 = vpop.trf.xlu0
    %v1691 = vpop.trf.xlu0
    %v1692 = vpop.trf.xlu0
    %v1693 = vpop.trf.xlu0
    %v1694 = vpop.trf.xlu0
    %v1695 = vpop.trf.xlu0
    %s1696 = scalar_lea.vmem [#allocation6], 24
    %1697 = vst.msk [vmem:[%s1696] sm:$0xff] %vm294, %v1456
    %1698 = vst.msk [vmem:[%s1696 + $0x20] sm:$0xff] %vm294, %v1488
    %1699 = vst.msk [vmem:[%s1696 + $0x40] sm:$0xff] %vm294, %v1520
    %1700 = vst.msk [vmem:[%s1696 + $0x60] sm:$0xff] %vm294, %v1552
    %1701 = vst.msk [vmem:[%s1696 + $0x80] sm:$0xff] %vm294, %v1584
    %1702 = vst.msk [vmem:[%s1696 + $0xa0] sm:$0xff] %vm294, %v1616
    %1703 = vst.msk [vmem:[%s1696 + $0xc0] sm:$0xff] %vm294, %v1648
    %1704 = vst.msk [vmem:[%s1696 + $0xe0] sm:$0xff] %vm294, %v1680
    // Predicated region
    $region10: #{tpu_custom_call.1} parent=1 // pred_check
      _
    $region11: #{tpu_custom_call.1} parent=1 // pred_check_branch
      %1706 = sbr.rel (0) target = $region13
    $region12: #{tpu_custom_call.1} parent=1 // pred_region
      %s1708 = ssub.s32 4096, 4096
      %1709 = vsyncadd [#allocation5], %s1708
      %s1710 = sshll.u32 [#allocation6], 4
      %s1711 = int_to_ptr.vmem [resolvable:$true] %s1710
      %1716 = dma.vmem_to_hbm [thread:$0]  %s1711, 4096, %s1, [#allocation5], 128, 128, 8
    $region13: #{tpu_custom_call.1} parent=1 // pred_fallthru
      _
    // Predicated region
    $region14: #{tpu_custom_call.1} parent=1 // pred_check
      _
    $region15: #{tpu_custom_call.1} parent=1 // pred_check_branch
      %1718 = sbr.rel (0) target = $region17
    $region16: #{tpu_custom_call.1} parent=1 // pred_region
      %1719 = dma.done [#allocation5], 4096
    $region17: #{tpu_custom_call.1} parent=1 // pred_fallthru
      _
    %1720 = vsyncpa [#allocation4], 1
    %1721 = vsyncpa [#allocation5], 1

</llo_original>
